<compile_context>
chip_gen: v7x
topology: tpu7x:2x2x1
jax: 0.10.0
libtpu: 0.0.40
codegen_flags: <defaults>
</compile_context>

<pallas_src>
import functools

import jax
import jax.numpy as jnp
from jax.experimental import pallas as pl
from jax.experimental.pallas import tpu as pltpu


def _ae3_kernel(state_dim, reward_dim,
                state_ref, reward_ref,
                w1s_ref, w1r_ref, b1_ref,
                w2_ref, s2_ref, b2_ref,
                wz_ref, bz_ref,
                w3_ref, b3_ref,
                w4_ref, s4_ref, b4_ref,
                wx_ref, bx_ref,
                out_ref):
    f32 = jnp.float32
    bf16 = jnp.bfloat16

    state = state_ref[...]
    reward = reward_ref[...]

    # ---- e1: fused concat via a split first layer (no (B, sr) scratch) ----
    y = jnp.dot(state.astype(bf16), w1s_ref[...], preferred_element_type=f32)
    if reward_dim == 1:
        # (B,1) * (1,512) broadcast multiply-add on the VPU.
        y = y + reward * w1r_ref[...]
    else:
        y = y + jnp.dot(reward, w1r_ref[...], preferred_element_type=f32)
    a = jnp.maximum(y + b1_ref[...], 0.0)

    # ---- e2: int8-stored weights (HBM traffic), bf16 MXU, per-col scale on f32 acc ----
    y = jnp.dot(a.astype(bf16), w2_ref[...].astype(bf16), preferred_element_type=f32)
    a = jnp.maximum(y * s2_ref[...] + b2_ref[...], 0.0)

    # ---- z_layer ----
    z = jnp.dot(a.astype(bf16), wz_ref[...], preferred_element_type=f32) + bz_ref[...]

    # ---- d1 ----
    y = jnp.dot(z.astype(bf16), w3_ref[...], preferred_element_type=f32) + b3_ref[...]
    b = jnp.maximum(y, 0.0)

    # ---- d2: int8-stored weights ----
    y = jnp.dot(b.astype(bf16), w4_ref[...].astype(bf16), preferred_element_type=f32)
    b = jnp.maximum(y * s4_ref[...] + b4_ref[...], 0.0)

    # ---- x_bar_layer ----
    xbar = jnp.dot(b.astype(bf16), wx_ref[...], preferred_element_type=f32) + bx_ref[...]

    # Single lane-contiguous packed output buffer: [ z | x_bar ].
    out_ref[:, 0:state_dim] = z.astype(out_ref.dtype)
    out_ref[:, state_dim:] = xbar.astype(out_ref.dtype)


def prepare_params(params, state_dim):
    """One-time weight preparation (do once, reuse across calls):
       * w1 split into state / reward halves (fused-concat -> split first layer),
       * w2 / w4 quantized to int8 with per-output-channel f32 scales,
       * remaining weights cast to bf16, biases kept f32.
    """
    def quant_int8(w):
        amax = jnp.max(jnp.abs(w), axis=0, keepdims=True)            # (1, out)
        scale = jnp.where(amax > 0, amax / 127.0, 1.0).astype(jnp.float32)
        q = jnp.clip(jnp.round(w / scale), -127, 127).astype(jnp.int8)
        return q, scale

    w2q, s2 = quant_int8(params["w2"])
    w4q, s4 = quant_int8(params["w4"])
    return {
        "w1s": params["w1"][:state_dim].astype(jnp.bfloat16),
        "w1r": params["w1"][state_dim:].astype(jnp.float32),
        "b1": params["b1"].astype(jnp.float32),
        "w2": w2q, "s2": s2, "b2": params["b2"].astype(jnp.float32),
        "wz": params["wz"].astype(jnp.bfloat16), "bz": params["bz"].astype(jnp.float32),
        "w3": params["w3"].astype(jnp.bfloat16), "b3": params["b3"].astype(jnp.float32),
        "w4": w4q, "s4": s4, "b4": params["b4"].astype(jnp.float32),
        "wx": params["wx"].astype(jnp.bfloat16), "bx": params["bx"].astype(jnp.float32),
    }


def _const_weight_spec(shape):
    """Weight spec for the grid path: constant index_map, single buffer."""
    index_map = lambda i, _n=len(shape): (0,) * _n
    try:
        return pl.BlockSpec(shape, index_map, pipeline_mode=pl.Buffered(1))
    except TypeError:   # pipeline_mode not available in this jax version
        return pl.BlockSpec(shape, index_map)


def ae3_forward(state, reward, prep, *, batch_tile=512, gridless_max=512):
    """state: (B, state_dim) f32, reward: (B, reward_dim) f32, prep from prepare_params.
    Returns (encoder_state, decoder_state) in f32."""
    B, state_dim = state.shape
    reward_dim = reward.shape[1]
    sr_dim = state_dim + reward_dim
    out_dim = state_dim + sr_dim
    hidden = prep["w2"].shape[0]

    kernel = functools.partial(_ae3_kernel, state_dim, reward_dim)

    weight_ops = (prep["w1s"], prep["w1r"], prep["b1"],
                  prep["w2"], prep["s2"], prep["b2"],
                  prep["wz"], prep["bz"],
                  prep["w3"], prep["b3"],
                  prep["w4"], prep["s4"], prep["b4"],
                  prep["wx"], prep["bx"])

    weight_bytes = sum(int(x.size) * x.dtype.itemsize for x in weight_ops)
    macs_per_row = (sr_dim * hidden + hidden * hidden + hidden * state_dim
                    + state_dim * hidden + hidden * hidden + hidden * sr_dim)

    def cost(rows):
        return pl.CostEstimate(
            flops=2 * rows * macs_per_row,
            transcendentals=0,
            bytes_accessed=weight_bytes + rows * (state_dim + reward_dim + out_dim) * 4)

    vmem_cap = 32 << 20  # headroom for the bigger tiles; safe on v5e/v6e/v7x

    if B <= gridless_max:
        # Small/medium batch: single full-block invocation, no grid (no per-step
        # overhead, no per-core weight duplication on v7x).
        full = lambda shp: pl.BlockSpec(shp, lambda _s=shp: (0,) * len(_s))
        in_specs = [full(state.shape), full(reward.shape)] + [full(w.shape) for w in weight_ops]
        out = pl.pallas_call(
            kernel,
            out_shape=jax.ShapeDtypeStruct((B, out_dim), jnp.float32),
            in_specs=in_specs,
            out_specs=full((B, out_dim)),
            compiler_params=pltpu.CompilerParams(vmem_limit_bytes=vmem_cap),
            cost_estimate=cost(B),
        )(state, reward, *weight_ops)
        return out[:, :state_dim], out[:, state_dim:]

    # Batched path: grid over batch tiles; weights keep a constant index_map so
    # they stay VMEM-resident across tiles.
    TB = batch_tile
    Bp = ((B + TB - 1) // TB) * TB
    if Bp != B:
        pad = Bp - B
        state_p = jnp.pad(state, ((0, pad), (0, 0)))
        reward_p = jnp.pad(reward, ((0, pad), (0, 0)))
    else:
        state_p, reward_p = state, reward
    n_tiles = Bp // TB

    # Only split across TensorCores when each core gets >= 2 tiles; otherwise the
    # per-core weight-DMA duplication outweighs the parallelism.
    semantics = ("parallel",) if n_tiles >= 4 else ("arbitrary",)

    act_spec = lambda cols: pl.BlockSpec((TB, cols), lambda i: (i, 0))
    in_specs = ([act_spec(state_dim), act_spec(reward_dim)]
                + [_const_weight_spec(w.shape) for w in weight_ops])
    out_specs = act_spec(out_dim)

    out = pl.pallas_call(
        kernel,
        out_shape=jax.ShapeDtypeStruct((Bp, out_dim), jnp.float32),
        grid=(n_tiles,),
        in_specs=in_specs,
        out_specs=out_specs,
        compiler_params=pltpu.CompilerParams(
            dimension_semantics=semantics,
            vmem_limit_bytes=vmem_cap),
        cost_estimate=cost(Bp),
    )(state_p, reward_p, *weight_ops)
    return out[:B, :state_dim], out[:B, state_dim:]


def init_params(key, state_dim, reward_dim, hidden=512):
    """Deterministic synthetic params. Weights (in, out); biases (1, out). All f32."""
    dims = [
        ("w1", "b1", state_dim + reward_dim, hidden),
        ("w2", "b2", hidden, hidden),
        ("wz", "bz", hidden, state_dim),
        ("w3", "b3", state_dim, hidden),
        ("w4", "b4", hidden, hidden),
        ("wx", "bx", hidden, state_dim + reward_dim),
    ]
    params = {}
    for (wn, bn, fin, fout) in dims:
        key, kw, kb = jax.random.split(key, 3)
        bound = 1.0 / jnp.sqrt(jnp.float32(fin))   # mimic nn.Linear default init range
        params[wn] = jax.random.uniform(kw, (fin, fout), jnp.float32, -bound, bound)
        params[bn] = jax.random.uniform(kb, (1, fout), jnp.float32, -bound, bound)
    return params


def ae3_reference_f32(state, reward, p):
    """Original-module semantics in full f32."""
    sr = jnp.concatenate([state, reward], axis=1)
    a = jax.nn.relu(sr @ p["w1"] + p["b1"])
    a = jax.nn.relu(a @ p["w2"] + p["b2"])
    z = a @ p["wz"] + p["bz"]
    b = jax.nn.relu(z @ p["w3"] + p["b3"])
    b = jax.nn.relu(b @ p["w4"] + p["b4"])
    xbar = b @ p["wx"] + p["bx"]
    return z, xbar


def ae3_reference_matched(state, reward, prep):
    """Plain-XLA reference matching the kernel's mixed-precision math
    (bf16 activations/weights, int8+scale for w2/w4, f32 accumulate/bias)."""
    f32, bf16 = jnp.float32, jnp.bfloat16

    def dense(x, w, b, relu, scale=None):
        y = jnp.dot(x.astype(bf16), w.astype(bf16), preferred_element_type=f32)
        if scale is not None:
            y = y * scale
        y = y + b
        return jax.nn.relu(y) if relu else y

    y1 = jnp.dot(state.astype(bf16), prep["w1s"], preferred_element_type=f32)
    if reward.shape[1] == 1:
        y1 = y1 + reward * prep["w1r"]
    else:
        y1 = y1 + jnp.dot(reward, prep["w1r"], preferred_element_type=f32)
    a = jax.nn.relu(y1 + prep["b1"])
    a = dense(a, prep["w2"], prep["b2"], True, prep["s2"])
    z = dense(a, prep["wz"], prep["bz"], False)
    b = dense(z, prep["w3"], prep["b3"], True)
    b = dense(b, prep["w4"], prep["b4"], True, prep["s4"])
    xbar = dense(b, prep["wx"], prep["bx"], False)
    return z, xbar


if __name__ == "__main__":
    state_dim, reward_dim, batch = 16, 1, 8

    key = jax.random.PRNGKey(0)
    key, ks, kr, kp = jax.random.split(key, 4)
    state = jax.random.normal(ks, (batch, state_dim), jnp.float32)
    reward = jax.random.normal(kr, (batch, reward_dim), jnp.float32)
    params = init_params(kp, state_dim, reward_dim)
    prep = prepare_params(params, state_dim)   # one-time bf16/int8 weight prep

    # ---- Small-batch (gridless) path ----
    enc, dec = ae3_forward(state, reward, prep)
    jax.block_until_ready((enc, dec))
    assert enc.shape == (batch, state_dim)
    assert dec.shape == (batch, state_dim + reward_dim)

    enc_m, dec_m = ae3_reference_matched(state, reward, prep)
    assert jnp.allclose(enc, enc_m, atol=1e-2, rtol=1e-2)
    assert jnp.allclose(dec, dec_m, atol=1e-2, rtol=1e-2)

    # Fidelity vs the original f32 module (looser tol: bf16 acts + int8 w2/w4).
    enc_f, dec_f = ae3_reference_f32(state, reward, params)
    assert jnp.allclose(enc, enc_f, atol=1e-1, rtol=1e-1)
    assert jnp.allclose(dec, dec_f, atol=1e-1, rtol=1e-1)

    # ---- Batched (grid) path: exercises padding, batch tiling and megacore gating ----
    big_b = 2100   # -> padded to 2560 rows, 5 tiles of 512, "parallel" semantics
    kb1, kb2 = jax.random.split(jax.random.PRNGKey(1))
    big_state = jax.random.normal(kb1, (big_b, state_dim), jnp.float32)
    big_reward = jax.random.normal(kb2, (big_b, reward_dim), jnp.float32)
    enc2, dec2 = ae3_forward(big_state, big_reward, prep)
    jax.block_until_ready((enc2, dec2))
    assert enc2.shape == (big_b, state_dim)
    assert dec2.shape == (big_b, state_dim + reward_dim)
    enc2_m, dec2_m = ae3_reference_matched(big_state, big_reward, prep)
    assert jnp.allclose(enc2, enc2_m, atol=1e-2, rtol=1e-2)
    assert jnp.allclose(dec2, dec2_m, atol=1e-2, rtol=1e-2)

    print("KERNEL_OK")
</pallas_src>

<mosaic_0001>
module attributes {stable_mosaic.version = 11 : i64} {
  func.func @_ae3_kernel(%arg0: memref<8x16xf32, #tpu.memory_space<vmem>>, %arg1: memref<8x1xf32, #tpu.memory_space<vmem>>, %arg2: memref<16x512xbf16, #tpu.memory_space<vmem>>, %arg3: memref<1x512xf32, #tpu.memory_space<vmem>>, %arg4: memref<1x512xf32, #tpu.memory_space<vmem>>, %arg5: memref<512x512xi8, #tpu.memory_space<vmem>>, %arg6: memref<1x512xf32, #tpu.memory_space<vmem>>, %arg7: memref<1x512xf32, #tpu.memory_space<vmem>>, %arg8: memref<512x16xbf16, #tpu.memory_space<vmem>>, %arg9: memref<1x16xf32, #tpu.memory_space<vmem>>, %arg10: memref<16x512xbf16, #tpu.memory_space<vmem>>, %arg11: memref<1x512xf32, #tpu.memory_space<vmem>>, %arg12: memref<512x512xi8, #tpu.memory_space<vmem>>, %arg13: memref<1x512xf32, #tpu.memory_space<vmem>>, %arg14: memref<1x512xf32, #tpu.memory_space<vmem>>, %arg15: memref<512x17xbf16, #tpu.memory_space<vmem>>, %arg16: memref<1x17xf32, #tpu.memory_space<vmem>>, %arg17: memref<8x33xf32, #tpu.memory_space<vmem>>) attributes {dimension_semantics = [], scalar_prefetch = 0 : i64, scratch_operands = 0 : i64, tpu.core_type = #tpu.core_type<tc>} {
    %c0 = arith.constant 0 : index
    %c0_0 = arith.constant 0 : index
    %0 = vector.load %arg0[%c0, %c0_0] : memref<8x16xf32, #tpu.memory_space<vmem>>, vector<8x16xf32>
    %c0_1 = arith.constant 0 : index
    %c0_2 = arith.constant 0 : index
    %1 = vector.load %arg1[%c0_1, %c0_2] : memref<8x1xf32, #tpu.memory_space<vmem>>, vector<8x1xf32>
    %2 = arith.truncf %0 : vector<8x16xf32> to vector<8x16xbf16>
    %c0_3 = arith.constant 0 : index
    %c0_4 = arith.constant 0 : index
    %3 = vector.load %arg2[%c0_3, %c0_4] : memref<16x512xbf16, #tpu.memory_space<vmem>>, vector<16x512xbf16>
    %cst = arith.constant dense<0.000000e+00> : vector<8x512xf32>
    %4 = tpu.matmul %2, %3, %cst {dimension_numbers = #tpu.dot_dimension_numbers<[1], [0], [0], [1], [0, 0, 1, 1], [], []>} : vector<8x16xbf16>, vector<16x512xbf16>, vector<8x512xf32> -> vector<8x512xf32>
    %c0_5 = arith.constant 0 : index
    %c0_6 = arith.constant 0 : index
    %5 = vector.load %arg3[%c0_5, %c0_6] : memref<1x512xf32, #tpu.memory_space<vmem>>, vector<1x512xf32>
    %6 = vector.broadcast %1 : vector<8x1xf32> to vector<8x512xf32>
    %7 = vector.broadcast %5 : vector<1x512xf32> to vector<8x512xf32>
    %8 = arith.mulf %6, %7 : vector<8x512xf32>
    %9 = arith.addf %4, %8 : vector<8x512xf32>
    %c0_7 = arith.constant 0 : index
    %c0_8 = arith.constant 0 : index
    %10 = vector.load %arg4[%c0_7, %c0_8] : memref<1x512xf32, #tpu.memory_space<vmem>>, vector<1x512xf32>
    %11 = vector.broadcast %10 : vector<1x512xf32> to vector<8x512xf32>
    %12 = arith.addf %9, %11 : vector<8x512xf32>
    %cst_9 = arith.constant 0.000000e+00 : f32
    %13 = vector.broadcast %cst_9 : f32 to vector<8x512xf32>
    %14 = arith.maximumf %12, %13 : vector<8x512xf32>
    %15 = arith.truncf %14 : vector<8x512xf32> to vector<8x512xbf16>
    %c0_10 = arith.constant 0 : index
    %c0_11 = arith.constant 0 : index
    %16 = vector.load %arg5[%c0_10, %c0_11] : memref<512x512xi8, #tpu.memory_space<vmem>>, vector<512x512xi8>
    %17 = arith.sitofp %16 : vector<512x512xi8> to vector<512x512xbf16>
    %cst_12 = arith.constant dense<0.000000e+00> : vector<8x512xf32>
    %18 = tpu.matmul %15, %17, %cst_12 {dimension_numbers = #tpu.dot_dimension_numbers<[1], [0], [0], [1], [0, 0, 1, 1], [], []>} : vector<8x512xbf16>, vector<512x512xbf16>, vector<8x512xf32> -> vector<8x512xf32>
    %c0_13 = arith.constant 0 : index
    %c0_14 = arith.constant 0 : index
    %19 = vector.load %arg6[%c0_13, %c0_14] : memref<1x512xf32, #tpu.memory_space<vmem>>, vector<1x512xf32>
    %20 = vector.broadcast %19 : vector<1x512xf32> to vector<8x512xf32>
    %21 = arith.mulf %18, %20 : vector<8x512xf32>
    %c0_15 = arith.constant 0 : index
    %c0_16 = arith.constant 0 : index
    %22 = vector.load %arg7[%c0_15, %c0_16] : memref<1x512xf32, #tpu.memory_space<vmem>>, vector<1x512xf32>
    %23 = vector.broadcast %22 : vector<1x512xf32> to vector<8x512xf32>
    %24 = arith.addf %21, %23 : vector<8x512xf32>
    %cst_17 = arith.constant 0.000000e+00 : f32
    %25 = vector.broadcast %cst_17 : f32 to vector<8x512xf32>
    %26 = arith.maximumf %24, %25 : vector<8x512xf32>
    %27 = arith.truncf %26 : vector<8x512xf32> to vector<8x512xbf16>
    %c0_18 = arith.constant 0 : index
    %c0_19 = arith.constant 0 : index
    %28 = vector.load %arg8[%c0_18, %c0_19] : memref<512x16xbf16, #tpu.memory_space<vmem>>, vector<512x16xbf16>
    %cst_20 = arith.constant dense<0.000000e+00> : vector<8x16xf32>
    %29 = tpu.matmul %27, %28, %cst_20 {dimension_numbers = #tpu.dot_dimension_numbers<[1], [0], [0], [1], [0, 0, 1, 1], [], []>} : vector<8x512xbf16>, vector<512x16xbf16>, vector<8x16xf32> -> vector<8x16xf32>
    %c0_21 = arith.constant 0 : index
    %c0_22 = arith.constant 0 : index
    %30 = vector.load %arg9[%c0_21, %c0_22] : memref<1x16xf32, #tpu.memory_space<vmem>>, vector<1x16xf32>
    %31 = vector.broadcast %30 : vector<1x16xf32> to vector<8x16xf32>
    %32 = arith.addf %29, %31 : vector<8x16xf32>
    %33 = arith.truncf %32 : vector<8x16xf32> to vector<8x16xbf16>
    %c0_23 = arith.constant 0 : index
    %c0_24 = arith.constant 0 : index
    %34 = vector.load %arg10[%c0_23, %c0_24] : memref<16x512xbf16, #tpu.memory_space<vmem>>, vector<16x512xbf16>
    %cst_25 = arith.constant dense<0.000000e+00> : vector<8x512xf32>
    %35 = tpu.matmul %33, %34, %cst_25 {dimension_numbers = #tpu.dot_dimension_numbers<[1], [0], [0], [1], [0, 0, 1, 1], [], []>} : vector<8x16xbf16>, vector<16x512xbf16>, vector<8x512xf32> -> vector<8x512xf32>
    %c0_26 = arith.constant 0 : index
    %c0_27 = arith.constant 0 : index
    %36 = vector.load %arg11[%c0_26, %c0_27] : memref<1x512xf32, #tpu.memory_space<vmem>>, vector<1x512xf32>
    %37 = vector.broadcast %36 : vector<1x512xf32> to vector<8x512xf32>
    %38 = arith.addf %35, %37 : vector<8x512xf32>
    %cst_28 = arith.constant 0.000000e+00 : f32
    %39 = vector.broadcast %cst_28 : f32 to vector<8x512xf32>
    %40 = arith.maximumf %38, %39 : vector<8x512xf32>
    %41 = arith.truncf %40 : vector<8x512xf32> to vector<8x512xbf16>
    %c0_29 = arith.constant 0 : index
    %c0_30 = arith.constant 0 : index
    %42 = vector.load %arg12[%c0_29, %c0_30] : memref<512x512xi8, #tpu.memory_space<vmem>>, vector<512x512xi8>
    %43 = arith.sitofp %42 : vector<512x512xi8> to vector<512x512xbf16>
    %cst_31 = arith.constant dense<0.000000e+00> : vector<8x512xf32>
    %44 = tpu.matmul %41, %43, %cst_31 {dimension_numbers = #tpu.dot_dimension_numbers<[1], [0], [0], [1], [0, 0, 1, 1], [], []>} : vector<8x512xbf16>, vector<512x512xbf16>, vector<8x512xf32> -> vector<8x512xf32>
    %c0_32 = arith.constant 0 : index
    %c0_33 = arith.constant 0 : index
    %45 = vector.load %arg13[%c0_32, %c0_33] : memref<1x512xf32, #tpu.memory_space<vmem>>, vector<1x512xf32>
    %46 = vector.broadcast %45 : vector<1x512xf32> to vector<8x512xf32>
    %47 = arith.mulf %44, %46 : vector<8x512xf32>
    %c0_34 = arith.constant 0 : index
    %c0_35 = arith.constant 0 : index
    %48 = vector.load %arg14[%c0_34, %c0_35] : memref<1x512xf32, #tpu.memory_space<vmem>>, vector<1x512xf32>
    %49 = vector.broadcast %48 : vector<1x512xf32> to vector<8x512xf32>
    %50 = arith.addf %47, %49 : vector<8x512xf32>
    %cst_36 = arith.constant 0.000000e+00 : f32
    %51 = vector.broadcast %cst_36 : f32 to vector<8x512xf32>
    %52 = arith.maximumf %50, %51 : vector<8x512xf32>
    %53 = arith.truncf %52 : vector<8x512xf32> to vector<8x512xbf16>
    %c0_37 = arith.constant 0 : index
    %c0_38 = arith.constant 0 : index
    %54 = vector.load %arg15[%c0_37, %c0_38] : memref<512x17xbf16, #tpu.memory_space<vmem>>, vector<512x17xbf16>
    %cst_39 = arith.constant dense<0.000000e+00> : vector<8x17xf32>
    %55 = tpu.matmul %53, %54, %cst_39 {dimension_numbers = #tpu.dot_dimension_numbers<[1], [0], [0], [1], [0, 0, 1, 1], [], []>} : vector<8x512xbf16>, vector<512x17xbf16>, vector<8x17xf32> -> vector<8x17xf32>
    %c0_40 = arith.constant 0 : index
    %c0_41 = arith.constant 0 : index
    %56 = vector.load %arg16[%c0_40, %c0_41] : memref<1x17xf32, #tpu.memory_space<vmem>>, vector<1x17xf32>
    %57 = vector.broadcast %56 : vector<1x17xf32> to vector<8x17xf32>
    %58 = arith.addf %55, %57 : vector<8x17xf32>
    %c0_42 = arith.constant 0 : index
    %c0_43 = arith.constant 0 : index
    %59 = vector.load %arg17[%c0_42, %c0_43] : memref<8x33xf32, #tpu.memory_space<vmem>>, vector<8x16xf32>
    tpu.vector_store %arg17[%c0_42, %c0_43], %32 {strides = array<i32>} : memref<8x33xf32, #tpu.memory_space<vmem>>, vector<8x16xf32>,
    %c0_44 = arith.constant 0 : index
    %c16 = arith.constant 16 : index
    %60 = vector.load %arg17[%c0_44, %c16] : memref<8x33xf32, #tpu.memory_space<vmem>>, vector<8x17xf32>
    tpu.vector_store %arg17[%c0_44, %c16], %58 {strides = array<i32>} : memref<8x33xf32, #tpu.memory_space<vmem>>, vector<8x17xf32>,
    return
  }
}

</mosaic_0001>

<llo_original>
// kernel: tpu_custom_call.1
$region0: #{tpu_custom_call.1}
  #allocation0 [shape = 'u32[]', space=smem, size = 0x4, offset = 0x4, fixed_abs, tag = 'smem constant byte address 0x4 - core index']
  #allocation1 [shape = 'u32[144,128]{1,0:T(1,128)}', space=vmem, size = 0x12000, scoped, tag = 'internal scratch']
  %s0 = inlined_call_operand.hbm [shape: f32[8,16], index: 0, kind: input, shape index: {}]
  %s1 = inlined_call_operand.vmem [shape: f32[8,1], index: 1, kind: input, shape index: {}]
  %s2 = inlined_call_operand.vmem [shape: bf16[16,512], index: 2, kind: input, shape index: {}]
  %s3 = inlined_call_operand.vmem [shape: f32[1,512], index: 3, kind: input, shape index: {}]
  %s4 = inlined_call_operand.hbm [shape: f32[1,512], index: 4, kind: input, shape index: {}]
  %s5 = inlined_call_operand.vmem [shape: s8[512,512], index: 5, kind: input, shape index: {}]
  %s6 = inlined_call_operand.hbm [shape: f32[1,512], index: 6, kind: input, shape index: {}]
  %s7 = inlined_call_operand.hbm [shape: f32[1,512], index: 7, kind: input, shape index: {}]
  %s8 = inlined_call_operand.vmem [shape: bf16[512,16], index: 8, kind: input, shape index: {}]
  %s9 = inlined_call_operand.vmem [shape: f32[1,16], index: 9, kind: input, shape index: {}]
  %s10 = inlined_call_operand.hbm [shape: bf16[16,512], index: 10, kind: input, shape index: {}]
  %s11 = inlined_call_operand.vmem [shape: f32[1,512], index: 11, kind: input, shape index: {}]
  %s12 = inlined_call_operand.hbm [shape: s8[512,512], index: 12, kind: input, shape index: {}]
  %s13 = inlined_call_operand.vmem [shape: f32[1,512], index: 13, kind: input, shape index: {}]
  %s14 = inlined_call_operand.vmem [shape: f32[1,512], index: 14, kind: input, shape index: {}]
  %s15 = inlined_call_operand.vmem [shape: bf16[512,17], index: 15, kind: input, shape index: {}]
  %s16 = inlined_call_operand.vmem [shape: f32[1,17], index: 16, kind: input, shape index: {}]
  %s17 = inlined_call_operand.hbm [shape: f32[8,33], index: 17, kind: output, shape index: {}]
  %s18 = sld [smem:[#allocation0]]
  $region102: #{tpu_custom_call.1} parent=0
    _
  %s20 = ssub.s32 1, %s18
  %s21 = scalar_select 0, %s20, %s18
  $region1: #{tpu_custom_call.1} parent=0
    #allocation2 [shape = 'u8[4096]{0}', space=vmem, size = 0x1000, scoped, tag = 'input window, operand 0, single buffered']
    #allocation3 [shape = 's32[1]{0}', space=sflag, size = 0x4, scoped, tag = 'scoped memory for tpu_custom_call.1']
    #allocation4 [shape = 's32[1]{0}', space=sflag, size = 0x4, scoped, tag = 'scoped memory for tpu_custom_call.1']
    #allocation5 [shape = 'u8[2048]{0}', space=vmem, size = 0x800, scoped, tag = 'input window, operand 4, single buffered']
    #allocation6 [shape = 's32[1]{0}', space=sflag, size = 0x4, scoped, tag = 'scoped memory for tpu_custom_call.1']
    #allocation7 [shape = 'u8[2048]{0}', space=vmem, size = 0x800, scoped, tag = 'input window, operand 6, single buffered']
    #allocation8 [shape = 'u8[2048]{0}', space=vmem, size = 0x800, scoped, tag = 'input window, operand 7, single buffered']
    #allocation9 [shape = 's32[1]{0}', space=sflag, size = 0x4, scoped, tag = 'scoped memory for tpu_custom_call.1']
    #allocation10 [shape = 'u8[16384]{0}', space=vmem, size = 0x4000, scoped, tag = 'input window, operand 10, single buffered']
    #allocation11 [shape = 'u8[262144]{0}', space=vmem, size = 0x40000, scoped, tag = 'input window, operand 12, single buffered']
    #allocation12 [shape = 's32[1]{0}', space=sflag, size = 0x4, scoped, tag = 'scoped memory for tpu_custom_call.1']
    #allocation13 [shape = 'u8[4096]{0}', space=vmem, size = 0x1000, scoped, tag = 'output window, operand 0, single buffered']
    %22 = vsyncpa [#allocation3], 0
    %23 = vsyncpa [#allocation6], 0
    %24 = vsyncpa [#allocation9], 0
    %25 = vsyncpa [#allocation12], 0
    %26 = vsyncpa [#allocation4], 0
    // Predicated region
    $region2: #{tpu_custom_call.1} parent=1 // pred_check
      _
    $region3: #{tpu_custom_call.1} parent=1 // pred_check_branch
      %28 = sbr.rel (0) target = $region5
    $region4: #{tpu_custom_call.1} parent=1 // pred_region
      %s30 = ssub.s32 128, 128
      %31 = vsyncadd [#allocation3], %s30
      %s33 = sshll.u32 [#allocation2], 4
      %s34 = int_to_ptr.vmem [resolvable:$true] %s33
      %36 = dma.hbm_to_vmem [thread:$0]  %s0, 128, %s34, [#allocation3]
    $region5: #{tpu_custom_call.1} parent=1 // pred_fallthru
      _
    // Predicated region
    $region6: #{tpu_custom_call.1} parent=1 // pred_check
      _
    $region7: #{tpu_custom_call.1} parent=1 // pred_check_branch
      %38 = sbr.rel (0) target = $region9
    $region8: #{tpu_custom_call.1} parent=1 // pred_region
      _
    $region9: #{tpu_custom_call.1} parent=1 // pred_fallthru
      _
    // Predicated region
    $region10: #{tpu_custom_call.1} parent=1 // pred_check
      _
    $region11: #{tpu_custom_call.1} parent=1 // pred_check_branch
      %40 = sbr.rel (0) target = $region13
    $region12: #{tpu_custom_call.1} parent=1 // pred_region
      _
    $region13: #{tpu_custom_call.1} parent=1 // pred_fallthru
      _
    // Predicated region
    $region14: #{tpu_custom_call.1} parent=1 // pred_check
      _
    $region15: #{tpu_custom_call.1} parent=1 // pred_check_branch
      %42 = sbr.rel (0) target = $region17
    $region16: #{tpu_custom_call.1} parent=1 // pred_region
      _
    $region17: #{tpu_custom_call.1} parent=1 // pred_fallthru
      _
    // Predicated region
    $region18: #{tpu_custom_call.1} parent=1 // pred_check
      _
    $region19: #{tpu_custom_call.1} parent=1 // pred_check_branch
      %44 = sbr.rel (0) target = $region21
    $region20: #{tpu_custom_call.1} parent=1 // pred_region
      %s46 = ssub.s32 64, 64
      %47 = vsyncadd [#allocation6], %s46
      %s49 = sshll.u32 [#allocation5], 4
      %s50 = int_to_ptr.vmem [resolvable:$true] %s49
      %52 = dma.hbm_to_vmem [thread:$0]  %s4, 64, %s50, [#allocation6]
    $region21: #{tpu_custom_call.1} parent=1 // pred_fallthru
      _
    // Predicated region
    $region22: #{tpu_custom_call.1} parent=1 // pred_check
      _
    $region23: #{tpu_custom_call.1} parent=1 // pred_check_branch
      %54 = sbr.rel (0) target = $region25
    $region24: #{tpu_custom_call.1} parent=1 // pred_region
      _
    $region25: #{tpu_custom_call.1} parent=1 // pred_fallthru
      _
    // Predicated region
    $region26: #{tpu_custom_call.1} parent=1 // pred_check
      _
    $region27: #{tpu_custom_call.1} parent=1 // pred_check_branch
      %56 = sbr.rel (0) target = $region29
    $region28: #{tpu_custom_call.1} parent=1 // pred_region
      %s58 = ssub.s32 64, 64
      %59 = vsyncadd [#allocation6], %s58
      %s61 = sshll.u32 [#allocation7], 4
      %s62 = int_to_ptr.vmem [resolvable:$true] %s61
      %64 = dma.hbm_to_vmem [thread:$0]  %s6, 64, %s62, [#allocation6]
    $region29: #{tpu_custom_call.1} parent=1 // pred_fallthru
      _
    // Predicated region
    $region30: #{tpu_custom_call.1} parent=1 // pred_check
      _
    $region31: #{tpu_custom_call.1} parent=1 // pred_check_branch
      %66 = sbr.rel (0) target = $region33
    $region32: #{tpu_custom_call.1} parent=1 // pred_region
      %s68 = ssub.s32 64, 64
      %69 = vsyncadd [#allocation9], %s68
      %s71 = sshll.u32 [#allocation8], 4
      %s72 = int_to_ptr.vmem [resolvable:$true] %s71
      %74 = dma.hbm_to_vmem [thread:$0]  %s7, 64, %s72, [#allocation9]
    $region33: #{tpu_custom_call.1} parent=1 // pred_fallthru
      _
    // Predicated region
    $region34: #{tpu_custom_call.1} parent=1 // pred_check
      _
    $region35: #{tpu_custom_call.1} parent=1 // pred_check_branch
      %76 = sbr.rel (0) target = $region37
    $region36: #{tpu_custom_call.1} parent=1 // pred_region
      _
    $region37: #{tpu_custom_call.1} parent=1 // pred_fallthru
      _
    // Predicated region
    $region38: #{tpu_custom_call.1} parent=1 // pred_check
      _
    $region39: #{tpu_custom_call.1} parent=1 // pred_check_branch
      %78 = sbr.rel (0) target = $region41
    $region40: #{tpu_custom_call.1} parent=1 // pred_region
      _
    $region41: #{tpu_custom_call.1} parent=1 // pred_fallthru
      _
    // Predicated region
    $region42: #{tpu_custom_call.1} parent=1 // pred_check
      _
    $region43: #{tpu_custom_call.1} parent=1 // pred_check_branch
      %80 = sbr.rel (0) target = $region45
    $region44: #{tpu_custom_call.1} parent=1 // pred_region
      %s82 = ssub.s32 512, 512
      %83 = vsyncadd [#allocation9], %s82
      %s84 = sshll.u32 [#allocation10], 4
      %s85 = int_to_ptr.vmem [resolvable:$true] %s84
      %90 = dma.hbm_to_vmem [thread:$0]  %s10, 512, %s85, [#allocation9], 256, 256, 16
    $region45: #{tpu_custom_call.1} parent=1 // pred_fallthru
      _
    // Predicated region
    $region46: #{tpu_custom_call.1} parent=1 // pred_check
      _
    $region47: #{tpu_custom_call.1} parent=1 // pred_check_branch
      %92 = sbr.rel (0) target = $region49
    $region48: #{tpu_custom_call.1} parent=1 // pred_region
      _
    $region49: #{tpu_custom_call.1} parent=1 // pred_fallthru
      _
    // Predicated region
    $region50: #{tpu_custom_call.1} parent=1 // pred_check
      _
    $region51: #{tpu_custom_call.1} parent=1 // pred_check_branch
      %94 = sbr.rel (0) target = $region53
    $region52: #{tpu_custom_call.1} parent=1 // pred_region
      %s96 = ssub.s32 8192, 8192
      %97 = vsyncadd [#allocation12], %s96
      %s98 = sshll.u32 [#allocation11], 4
      %s99 = int_to_ptr.vmem [resolvable:$true] %s98
      %104 = dma.hbm_to_vmem [thread:$0]  %s12, 8192, %s99, [#allocation12], 512, 512, 32
    $region53: #{tpu_custom_call.1} parent=1 // pred_fallthru
      _
    // Predicated region
    $region54: #{tpu_custom_call.1} parent=1 // pred_check
      _
    $region55: #{tpu_custom_call.1} parent=1 // pred_check_branch
      %106 = sbr.rel (0) target = $region57
    $region56: #{tpu_custom_call.1} parent=1 // pred_region
      _
    $region57: #{tpu_custom_call.1} parent=1 // pred_fallthru
      _
    // Predicated region
    $region58: #{tpu_custom_call.1} parent=1 // pred_check
      _
    $region59: #{tpu_custom_call.1} parent=1 // pred_check_branch
      %108 = sbr.rel (0) target = $region61
    $region60: #{tpu_custom_call.1} parent=1 // pred_region
      _
    $region61: #{tpu_custom_call.1} parent=1 // pred_fallthru
      _
    // Predicated region
    $region62: #{tpu_custom_call.1} parent=1 // pred_check
      _
    $region63: #{tpu_custom_call.1} parent=1 // pred_check_branch
      %110 = sbr.rel (0) target = $region65
    $region64: #{tpu_custom_call.1} parent=1 // pred_region
      _
    $region65: #{tpu_custom_call.1} parent=1 // pred_fallthru
      _
    // Predicated region
    $region66: #{tpu_custom_call.1} parent=1 // pred_check
      _
    $region67: #{tpu_custom_call.1} parent=1 // pred_check_branch
      %112 = sbr.rel (0) target = $region69
    $region68: #{tpu_custom_call.1} parent=1 // pred_region
      _
    $region69: #{tpu_custom_call.1} parent=1 // pred_fallthru
      _
    // Predicated region
    $region70: #{tpu_custom_call.1} parent=1 // pred_check
      _
    $region71: #{tpu_custom_call.1} parent=1 // pred_check_branch
      %114 = sbr.rel (0) target = $region73
    $region72: #{tpu_custom_call.1} parent=1 // pred_region
      %115 = dma.done [#allocation3], 128
    $region73: #{tpu_custom_call.1} parent=1 // pred_fallthru
      _
    // Predicated region
    $region74: #{tpu_custom_call.1} parent=1 // pred_check
      _
    $region75: #{tpu_custom_call.1} parent=1 // pred_check_branch
      %117 = sbr.rel (0) target = $region77
    $region76: #{tpu_custom_call.1} parent=1 // pred_region
      %118 = dma.done [#allocation6], 64
    $region77: #{tpu_custom_call.1} parent=1 // pred_fallthru
      _
    // Predicated region
    $region78: #{tpu_custom_call.1} parent=1 // pred_check
      _
    $region79: #{tpu_custom_call.1} parent=1 // pred_check_branch
      %120 = sbr.rel (0) target = $region81
    $region80: #{tpu_custom_call.1} parent=1 // pred_region
      %121 = dma.done [#allocation6], 64
    $region81: #{tpu_custom_call.1} parent=1 // pred_fallthru
      _
    // Predicated region
    $region82: #{tpu_custom_call.1} parent=1 // pred_check
      _
    $region83: #{tpu_custom_call.1} parent=1 // pred_check_branch
      %123 = sbr.rel (0) target = $region85
    $region84: #{tpu_custom_call.1} parent=1 // pred_region
      %124 = dma.done [#allocation9], 64
    $region85: #{tpu_custom_call.1} parent=1 // pred_fallthru
      _
    // Predicated region
    $region86: #{tpu_custom_call.1} parent=1 // pred_check
      _
    $region87: #{tpu_custom_call.1} parent=1 // pred_check_branch
      %126 = sbr.rel (0) target = $region89
    $region88: #{tpu_custom_call.1} parent=1 // pred_region
      %127 = dma.done [#allocation9], 512
    $region89: #{tpu_custom_call.1} parent=1 // pred_fallthru
      _
    // Predicated region
    $region90: #{tpu_custom_call.1} parent=1 // pred_check
      _
    $region91: #{tpu_custom_call.1} parent=1 // pred_check_branch
      %129 = sbr.rel (0) target = $region93
    $region92: #{tpu_custom_call.1} parent=1 // pred_region
      %130 = dma.done [#allocation12], 8192
    $region93: #{tpu_custom_call.1} parent=1 // pred_fallthru
      _
    %v132 = vld [vmem:[#allocation2] sm:$0xff]
    %v133 = vld [vmem:[%s1] sm:$0xff]
    %v134 = vpack.c.bf16 %v132, %v132
    %v135 = vld [vmem:[%s2] sm:$0xff]
    %v136 = vld [vmem:[%s2 + $0x8] sm:$0xff]
    %v137 = vld [vmem:[%s2 + $0x10] sm:$0xff]
    %v138 = vld [vmem:[%s2 + $0x18] sm:$0xff]
    %v139 = vld [vmem:[%s3] sm:$0xf]
    %141 = vset.pattern.permute.xlu0 0
    %142 = vperm.xlu0 %141, %v133
    %v143 = vpop.permute.xlu0 %142
    %v146 = vlaneseq
    %v147 = vshrl.u32 %v146, 7
    %v148 = vsub.s32 0, %v147
    %v149 = vrot.slane %v139, %v148
    %v150 = vlaneseq
    %v151 = vshrl.u32 %v150, 7
    %v152 = vsub.s32 1, %v151
    %v153 = vrot.slane %v139, %v152
    %v154 = vlaneseq
    %v155 = vshrl.u32 %v154, 7
    %v156 = vsub.s32 2, %v155
    %v157 = vrot.slane %v139, %v156
    %v158 = vlaneseq
    %v159 = vshrl.u32 %v158, 7
    %v160 = vsub.s32 3, %v159
    %v161 = vrot.slane %v139, %v160
    %v166 = vmul.f32 %v143, %v149
    %v167 = vmul.f32 %v143, %v153
    %v168 = vmul.f32 %v143, %v157
    %v169 = vmul.f32 %v143, %v161
    %v174 = vunpack.c.l.b16 %v135
    %v175 = vunpack.c.h.b16 %v135
    %v176 = vunpack.c.l.b16 %v136
    %v177 = vunpack.c.h.b16 %v136
    %v178 = vunpack.c.l.b16 %v137
    %v179 = vunpack.c.h.b16 %v137
    %v180 = vunpack.c.l.b16 %v138
    %v181 = vunpack.c.h.b16 %v138
    %v182 = vpack.c.b16 %v178, %v174
    %v183 = vpack.c.b16 %v179, %v175
    %v184 = vpack.c.b16 %v180, %v176
    %v185 = vpack.c.b16 %v181, %v177
    %vm190 = vcmask 130048
    %v192 = vsel %vm190, %v134, 0
    %194 = vmatprep.subr.bf16.mxu0 %v183
    %195 = vmatpush1.bf16.msra.mxu0 %v182
    %196 = vmatprep.subr.bf16.mxu0 0
    %197 = vmatpush1.bf16.msra.mxu0 0
    %198 = vmatprep.subr.bf16.mxu0 0
    %199 = vmatpush1.bf16.msra.mxu0 0
    %200 = vmatprep.subr.bf16.mxu0 0
    %201 = vmatpush1.bf16.msra.mxu0 0
    %202 = vmatprep.subr.bf16.mxu0 0
    %203 = vmatpush1.bf16.msra.mxu0 0
    %204 = vmatprep.subr.bf16.mxu0 0
    %205 = vmatpush1.bf16.msra.mxu0 0
    %206 = vmatprep.subr.bf16.mxu0 0
    %207 = vmatpush1.bf16.msra.mxu0 0
    %208 = vmatprep.subr.bf16.mxu0 0
    %209 = vmatpush1.bf16.msra.mxu0 0
    %210 = vmatprep.subr.bf16.mxu0 0
    %211 = vmatpush1.bf16.msra.mxu0 0
    %212 = vmatprep.subr.bf16.mxu0 0
    %213 = vmatpush1.bf16.msra.mxu0 0
    %214 = vmatprep.subr.bf16.mxu0 0
    %215 = vmatpush1.bf16.msra.mxu0 0
    %216 = vmatprep.subr.bf16.mxu0 0
    %217 = vmatpush1.bf16.msra.mxu0 0
    %218 = vmatprep.subr.bf16.mxu0 0
    %219 = vmatpush1.bf16.msra.mxu0 0
    %220 = vmatprep.subr.bf16.mxu0 0
    %221 = vmatpush1.bf16.msra.mxu0 0
    %222 = vmatprep.subr.bf16.mxu0 0
    %223 = vmatpush1.bf16.msra.mxu0 0
    %224 = vmatprep.subr.bf16.mxu0 0
    %225 = vmatpush1.bf16.msra.mxu0 0
    %226 = vmatprep.mubr.bf16.mxu0 0
    %227 = vmatmul.mubr.bf16.gmra.mrb[0].mxu0 %v192
    %v228 = vpop.f32.mrb[0].mxu0
    %v229 = vadd.f32 %v166, %v228
    %v230 = vpop.f32.mrb[0].mxu0
    %v231 = vadd.f32 %v167, %v230
    %v232 = vpop.f32.mrb[0].mxu0
    %v233 = vpop.f32.mrb[0].mxu0
    %234 = vdwg.mxu0
    %235 = vmatprep.subr.bf16.mxu0 %v185
    %236 = vmatpush1.bf16.msra.mxu0 %v184
    %237 = vmatprep.subr.bf16.mxu0 0
    %238 = vmatpush1.bf16.msra.mxu0 0
    %239 = vmatprep.subr.bf16.mxu0 0
    %240 = vmatpush1.bf16.msra.mxu0 0
    %241 = vmatprep.subr.bf16.mxu0 0
    %242 = vmatpush1.bf16.msra.mxu0 0
    %243 = vmatprep.subr.bf16.mxu0 0
    %244 = vmatpush1.bf16.msra.mxu0 0
    %245 = vmatprep.subr.bf16.mxu0 0
    %246 = vmatpush1.bf16.msra.mxu0 0
    %247 = vmatprep.subr.bf16.mxu0 0
    %248 = vmatpush1.bf16.msra.mxu0 0
    %249 = vmatprep.subr.bf16.mxu0 0
    %250 = vmatpush1.bf16.msra.mxu0 0
    %251 = vmatprep.subr.bf16.mxu0 0
    %252 = vmatpush1.bf16.msra.mxu0 0
    %253 = vmatprep.subr.bf16.mxu0 0
    %254 = vmatpush1.bf16.msra.mxu0 0
    %255 = vmatprep.subr.bf16.mxu0 0
    %256 = vmatpush1.bf16.msra.mxu0 0
    %257 = vmatprep.subr.bf16.mxu0 0
    %258 = vmatpush1.bf16.msra.mxu0 0
    %259 = vmatprep.subr.bf16.mxu0 0
    %260 = vmatpush1.bf16.msra.mxu0 0
    %261 = vmatprep.subr.bf16.mxu0 0
    %262 = vmatpush1.bf16.msra.mxu0 0
    %263 = vmatprep.subr.bf16.mxu0 0
    %264 = vmatpush1.bf16.msra.mxu0 0
    %265 = vmatprep.subr.bf16.mxu0 0
    %266 = vmatpush1.bf16.msra.mxu0 0
    %267 = vmatprep.mubr.bf16.mxu0 0
    %268 = vmatmul.mubr.bf16.gmra.mrb[0].mxu0 %v192
    %v269 = vpop.f32.mrb[0].mxu0
    %v270 = vadd.f32 %v168, %v269
    %v271 = vpop.f32.mrb[0].mxu0
    %v272 = vadd.f32 %v169, %v271
    %v273 = vpop.f32.mrb[0].mxu0
    %v274 = vpop.f32.mrb[0].mxu0
    %275 = vdwg.mxu0
    %v276 = vld [vmem:[#allocation5] sm:$0xf]
    %v278 = vlaneseq
    %v279 = vshrl.u32 %v278, 7
    %v280 = vsub.s32 0, %v279
    %v281 = vrot.slane %v276, %v280
    %v282 = vlaneseq
    %v283 = vshrl.u32 %v282, 7
    %v284 = vsub.s32 1, %v283
    %v285 = vrot.slane %v276, %v284
    %v286 = vlaneseq
    %v287 = vshrl.u32 %v286, 7
    %v288 = vsub.s32 2, %v287
    %v289 = vrot.slane %v276, %v288
    %v290 = vlaneseq
    %v291 = vshrl.u32 %v290, 7
    %v292 = vsub.s32 3, %v291
    %v293 = vrot.slane %v276, %v292
    %v298 = vadd.f32 %v229, %v281
    %v299 = vadd.f32 %v231, %v285
    %v300 = vadd.f32 %v270, %v289
    %v301 = vadd.f32 %v272, %v293
    %v302 = vmax.f32 %v298, 0.0
    %v303 = vmax.f32 %v299, 0.0
    %v304 = vmax.f32 %v300, 0.0
    %v305 = vmax.f32 %v301, 0.0
    %v306 = vpack.c.bf16 %v302, %v302
    %v307 = vpack.c.bf16 %v303, %v303
    %v308 = vpack.c.bf16 %v304, %v304
    %v309 = vpack.c.bf16 %v305, %v305
    %v310 = vld [vmem:[%s5] sm:$0xff]
    %v311 = vld [vmem:[%s5 + $0x8] sm:$0xff]
    %v312 = vld [vmem:[%s5 + $0x10] sm:$0xff]
    %v313 = vld [vmem:[%s5 + $0x18] sm:$0xff]
    %v314 = vld [vmem:[%s5 + $0x20] sm:$0xff]
    %v315 = vld [vmem:[%s5 + $0x28] sm:$0xff]
    %v316 = vld [vmem:[%s5 + $0x30] sm:$0xff]
    %v317 = vld [vmem:[%s5 + $0x38] sm:$0xff]
    %v318 = vld [vmem:[%s5 + $0x40] sm:$0xff]
    %v319 = vld [vmem:[%s5 + $0x48] sm:$0xff]
    %v320 = vld [vmem:[%s5 + $0x50] sm:$0xff]
    %v321 = vld [vmem:[%s5 + $0x58] sm:$0xff]
    %v322 = vld [vmem:[%s5 + $0x60] sm:$0xff]
    %v323 = vld [vmem:[%s5 + $0x68] sm:$0xff]
    %v324 = vld [vmem:[%s5 + $0x70] sm:$0xff]
    %v325 = vld [vmem:[%s5 + $0x78] sm:$0xff]
    %v326 = vld [vmem:[%s5 + $0x80] sm:$0xff]
    %v327 = vld [vmem:[%s5 + $0x88] sm:$0xff]
    %v328 = vld [vmem:[%s5 + $0x90] sm:$0xff]
    %v329 = vld [vmem:[%s5 + $0x98] sm:$0xff]
    %v330 = vld [vmem:[%s5 + $0xa0] sm:$0xff]
    %v331 = vld [vmem:[%s5 + $0xa8] sm:$0xff]
    %v332 = vld [vmem:[%s5 + $0xb0] sm:$0xff]
    %v333 = vld [vmem:[%s5 + $0xb8] sm:$0xff]
    %v334 = vld [vmem:[%s5 + $0xc0] sm:$0xff]
    %v335 = vld [vmem:[%s5 + $0xc8] sm:$0xff]
    %v336 = vld [vmem:[%s5 + $0xd0] sm:$0xff]
    %v337 = vld [vmem:[%s5 + $0xd8] sm:$0xff]
    %v338 = vld [vmem:[%s5 + $0xe0] sm:$0xff]
    %v339 = vld [vmem:[%s5 + $0xe8] sm:$0xff]
    %v340 = vld [vmem:[%s5 + $0xf0] sm:$0xff]
    %v341 = vld [vmem:[%s5 + $0xf8] sm:$0xff]
    %v342 = vld [vmem:[%s5 + $0x100] sm:$0xff]
    %v343 = vld [vmem:[%s5 + $0x108] sm:$0xff]
    %v344 = vld [vmem:[%s5 + $0x110] sm:$0xff]
    %v345 = vld [vmem:[%s5 + $0x118] sm:$0xff]
    %v346 = vld [vmem:[%s5 + $0x120] sm:$0xff]
    %v347 = vld [vmem:[%s5 + $0x128] sm:$0xff]
    %v348 = vld [vmem:[%s5 + $0x130] sm:$0xff]
    %v349 = vld [vmem:[%s5 + $0x138] sm:$0xff]
    %v350 = vld [vmem:[%s5 + $0x140] sm:$0xff]
    %v351 = vld [vmem:[%s5 + $0x148] sm:$0xff]
    %v352 = vld [vmem:[%s5 + $0x150] sm:$0xff]
    %v353 = vld [vmem:[%s5 + $0x158] sm:$0xff]
    %v354 = vld [vmem:[%s5 + $0x160] sm:$0xff]
    %v355 = vld [vmem:[%s5 + $0x168] sm:$0xff]
    %v356 = vld [vmem:[%s5 + $0x170] sm:$0xff]
    %v357 = vld [vmem:[%s5 + $0x178] sm:$0xff]
    %v358 = vld [vmem:[%s5 + $0x180] sm:$0xff]
    %v359 = vld [vmem:[%s5 + $0x188] sm:$0xff]
    %v360 = vld [vmem:[%s5 + $0x190] sm:$0xff]
    %v361 = vld [vmem:[%s5 + $0x198] sm:$0xff]
    %v362 = vld [vmem:[%s5 + $0x1a0] sm:$0xff]
    %v363 = vld [vmem:[%s5 + $0x1a8] sm:$0xff]
    %v364 = vld [vmem:[%s5 + $0x1b0] sm:$0xff]
    %v365 = vld [vmem:[%s5 + $0x1b8] sm:$0xff]
    %v366 = vld [vmem:[%s5 + $0x1c0] sm:$0xff]
    %v367 = vld [vmem:[%s5 + $0x1c8] sm:$0xff]
    %v368 = vld [vmem:[%s5 + $0x1d0] sm:$0xff]
    %v369 = vld [vmem:[%s5 + $0x1d8] sm:$0xff]
    %v370 = vld [vmem:[%s5 + $0x1e0] sm:$0xff]
    %v371 = vld [vmem:[%s5 + $0x1e8] sm:$0xff]
    %v372 = vld [vmem:[%s5 + $0x1f0] sm:$0xff]
    %v373 = vld [vmem:[%s5 + $0x1f8] sm:$0xff]
    %v374 = vunpack.c.l.s8.bf16 %v310
    %v375 = vunpack.c.l.s8.bf16 %v311
    %v376 = vunpack.c.l.s8.bf16 %v312
    %v377 = vunpack.c.l.s8.bf16 %v313
    %v378 = vunpack.c.h.s8.bf16 %v310
    %v379 = vunpack.c.h.s8.bf16 %v311
    %v380 = vunpack.c.h.s8.bf16 %v312
    %v381 = vunpack.c.h.s8.bf16 %v313
    %v382 = vunpack.c.l.s8.bf16 %v314
    %v383 = vunpack.c.l.s8.bf16 %v315
    %v384 = vunpack.c.l.s8.bf16 %v316
    %v385 = vunpack.c.l.s8.bf16 %v317
    %v386 = vunpack.c.h.s8.bf16 %v314
    %v387 = vunpack.c.h.s8.bf16 %v315
    %v388 = vunpack.c.h.s8.bf16 %v316
    %v389 = vunpack.c.h.s8.bf16 %v317
    %v390 = vunpack.c.l.s8.bf16 %v318
    %v391 = vunpack.c.l.s8.bf16 %v319
    %v392 = vunpack.c.l.s8.bf16 %v320
    %v393 = vunpack.c.l.s8.bf16 %v321
    %v394 = vunpack.c.h.s8.bf16 %v318
    %v395 = vunpack.c.h.s8.bf16 %v319
    %v396 = vunpack.c.h.s8.bf16 %v320
    %v397 = vunpack.c.h.s8.bf16 %v321
    %v398 = vunpack.c.l.s8.bf16 %v322
    %v399 = vunpack.c.l.s8.bf16 %v323
    %v400 = vunpack.c.l.s8.bf16 %v324
    %v401 = vunpack.c.l.s8.bf16 %v325
    %v402 = vunpack.c.h.s8.bf16 %v322
    %v403 = vunpack.c.h.s8.bf16 %v323
    %v404 = vunpack.c.h.s8.bf16 %v324
    %v405 = vunpack.c.h.s8.bf16 %v325
    %v406 = vunpack.c.l.s8.bf16 %v326
    %v407 = vunpack.c.l.s8.bf16 %v327
    %v408 = vunpack.c.l.s8.bf16 %v328
    %v409 = vunpack.c.l.s8.bf16 %v329
    %v410 = vunpack.c.h.s8.bf16 %v326
    %v411 = vunpack.c.h.s8.bf16 %v327
    %v412 = vunpack.c.h.s8.bf16 %v328
    %v413 = vunpack.c.h.s8.bf16 %v329
    %v414 = vunpack.c.l.s8.bf16 %v330
    %v415 = vunpack.c.l.s8.bf16 %v331
    %v416 = vunpack.c.l.s8.bf16 %v332
    %v417 = vunpack.c.l.s8.bf16 %v333
    %v418 = vunpack.c.h.s8.bf16 %v330
    %v419 = vunpack.c.h.s8.bf16 %v331
    %v420 = vunpack.c.h.s8.bf16 %v332
    %v421 = vunpack.c.h.s8.bf16 %v333
    %v422 = vunpack.c.l.s8.bf16 %v334
    %v423 = vunpack.c.l.s8.bf16 %v335
    %v424 = vunpack.c.l.s8.bf16 %v336
    %v425 = vunpack.c.l.s8.bf16 %v337
    %v426 = vunpack.c.h.s8.bf16 %v334
    %v427 = vunpack.c.h.s8.bf16 %v335
    %v428 = vunpack.c.h.s8.bf16 %v336
    %v429 = vunpack.c.h.s8.bf16 %v337
    %v430 = vunpack.c.l.s8.bf16 %v338
    %v431 = vunpack.c.l.s8.bf16 %v339
    %v432 = vunpack.c.l.s8.bf16 %v340
    %v433 = vunpack.c.l.s8.bf16 %v341
    %v434 = vunpack.c.h.s8.bf16 %v338
    %v435 = vunpack.c.h.s8.bf16 %v339
    %v436 = vunpack.c.h.s8.bf16 %v340
    %v437 = vunpack.c.h.s8.bf16 %v341
    %v438 = vunpack.c.l.s8.bf16 %v342
    %v439 = vunpack.c.l.s8.bf16 %v343
    %v440 = vunpack.c.l.s8.bf16 %v344
    %v441 = vunpack.c.l.s8.bf16 %v345
    %v442 = vunpack.c.h.s8.bf16 %v342
    %v443 = vunpack.c.h.s8.bf16 %v343
    %v444 = vunpack.c.h.s8.bf16 %v344
    %v445 = vunpack.c.h.s8.bf16 %v345
    %v446 = vunpack.c.l.s8.bf16 %v346
    %v447 = vunpack.c.l.s8.bf16 %v347
    %v448 = vunpack.c.l.s8.bf16 %v348
    %v449 = vunpack.c.l.s8.bf16 %v349
    %v450 = vunpack.c.h.s8.bf16 %v346
    %v451 = vunpack.c.h.s8.bf16 %v347
    %v452 = vunpack.c.h.s8.bf16 %v348
    %v453 = vunpack.c.h.s8.bf16 %v349
    %v454 = vunpack.c.l.s8.bf16 %v350
    %v455 = vunpack.c.l.s8.bf16 %v351
    %v456 = vunpack.c.l.s8.bf16 %v352
    %v457 = vunpack.c.l.s8.bf16 %v353
    %v458 = vunpack.c.h.s8.bf16 %v350
    %v459 = vunpack.c.h.s8.bf16 %v351
    %v460 = vunpack.c.h.s8.bf16 %v352
    %v461 = vunpack.c.h.s8.bf16 %v353
    %v462 = vunpack.c.l.s8.bf16 %v354
    %v463 = vunpack.c.l.s8.bf16 %v355
    %v464 = vunpack.c.l.s8.bf16 %v356
    %v465 = vunpack.c.l.s8.bf16 %v357
    %v466 = vunpack.c.h.s8.bf16 %v354
    %v467 = vunpack.c.h.s8.bf16 %v355
    %v468 = vunpack.c.h.s8.bf16 %v356
    %v469 = vunpack.c.h.s8.bf16 %v357
    %v470 = vunpack.c.l.s8.bf16 %v358
    %v471 = vunpack.c.l.s8.bf16 %v359
    %v472 = vunpack.c.l.s8.bf16 %v360
    %v473 = vunpack.c.l.s8.bf16 %v361
    %v474 = vunpack.c.h.s8.bf16 %v358
    %v475 = vunpack.c.h.s8.bf16 %v359
    %v476 = vunpack.c.h.s8.bf16 %v360
    %v477 = vunpack.c.h.s8.bf16 %v361
    %v478 = vunpack.c.l.s8.bf16 %v362
    %v479 = vunpack.c.l.s8.bf16 %v363
    %v480 = vunpack.c.l.s8.bf16 %v364
    %v481 = vunpack.c.l.s8.bf16 %v365
    %v482 = vunpack.c.h.s8.bf16 %v362
    %v483 = vunpack.c.h.s8.bf16 %v363
    %v484 = vunpack.c.h.s8.bf16 %v364
    %v485 = vunpack.c.h.s8.bf16 %v365
    %v486 = vunpack.c.l.s8.bf16 %v366
    %v487 = vunpack.c.l.s8.bf16 %v367
    %v488 = vunpack.c.l.s8.bf16 %v368
    %v489 = vunpack.c.l.s8.bf16 %v369
    %v490 = vunpack.c.h.s8.bf16 %v366
    %v491 = vunpack.c.h.s8.bf16 %v367
    %v492 = vunpack.c.h.s8.bf16 %v368
    %v493 = vunpack.c.h.s8.bf16 %v369
    %v494 = vunpack.c.l.s8.bf16 %v370
    %v495 = vunpack.c.l.s8.bf16 %v371
    %v496 = vunpack.c.l.s8.bf16 %v372
    %v497 = vunpack.c.l.s8.bf16 %v373
    %v498 = vunpack.c.h.s8.bf16 %v370
    %v499 = vunpack.c.h.s8.bf16 %v371
    %v500 = vunpack.c.h.s8.bf16 %v372
    %v501 = vunpack.c.h.s8.bf16 %v373
    %502 = vmatprep.subr.bf16.mxu0 %v375
    %503 = vmatpush1.bf16.msra.mxu0 %v374
    %504 = vmatprep.subr.bf16.mxu0 %v379
    %505 = vmatpush1.bf16.msra.mxu0 %v378
    %506 = vmatprep.subr.bf16.mxu0 %v383
    %507 = vmatpush1.bf16.msra.mxu0 %v382
    %508 = vmatprep.subr.bf16.mxu0 %v387
    %509 = vmatpush1.bf16.msra.mxu0 %v386
    %510 = vmatprep.subr.bf16.mxu0 %v391
    %511 = vmatpush1.bf16.msra.mxu0 %v390
    %512 = vmatprep.subr.bf16.mxu0 %v395
    %513 = vmatpush1.bf16.msra.mxu0 %v394
    %514 = vmatprep.subr.bf16.mxu0 %v399
    %515 = vmatpush1.bf16.msra.mxu0 %v398
    %516 = vmatprep.subr.bf16.mxu0 %v403
    %517 = vmatpush1.bf16.msra.mxu0 %v402
    %518 = vmatprep.subr.bf16.mxu0 %v407
    %519 = vmatpush1.bf16.msra.mxu0 %v406
    %520 = vmatprep.subr.bf16.mxu0 %v411
    %521 = vmatpush1.bf16.msra.mxu0 %v410
    %522 = vmatprep.subr.bf16.mxu0 %v415
    %523 = vmatpush1.bf16.msra.mxu0 %v414
    %524 = vmatprep.subr.bf16.mxu0 %v419
    %525 = vmatpush1.bf16.msra.mxu0 %v418
    %526 = vmatprep.subr.bf16.mxu0 %v423
    %527 = vmatpush1.bf16.msra.mxu0 %v422
    %528 = vmatprep.subr.bf16.mxu0 %v427
    %529 = vmatpush1.bf16.msra.mxu0 %v426
    %530 = vmatprep.subr.bf16.mxu0 %v431
    %531 = vmatpush1.bf16.msra.mxu0 %v430
    %532 = vmatprep.subr.bf16.mxu0 %v435
    %533 = vmatpush1.bf16.msra.mxu0 %v434
    %534 = vmatprep.mubr.bf16.mxu0 %v307
    %535 = vmatmul.mubr.bf16.gmra.mrb[0].mxu0 %v306
    %v536 = vpop.f32.mrb[0].mxu0
    %v537 = vadd.f32 0.0, %v536
    %v538 = vpop.f32.mrb[0].mxu0
    %v539 = vadd.f32 0.0, %v538
    %v540 = vpop.f32.mrb[0].mxu0
    %v541 = vpop.f32.mrb[0].mxu0
    %542 = vdwg.mxu0
    %543 = vmatprep.subr.bf16.mxu0 %v439
    %544 = vmatpush1.bf16.msra.mxu0 %v438
    %545 = vmatprep.subr.bf16.mxu0 %v443
    %546 = vmatpush1.bf16.msra.mxu0 %v442
    %547 = vmatprep.subr.bf16.mxu0 %v447
    %548 = vmatpush1.bf16.msra.mxu0 %v446
    %549 = vmatprep.subr.bf16.mxu0 %v451
    %550 = vmatpush1.bf16.msra.mxu0 %v450
    %551 = vmatprep.subr.bf16.mxu0 %v455
    %552 = vmatpush1.bf16.msra.mxu0 %v454
    %553 = vmatprep.subr.bf16.mxu0 %v459
    %554 = vmatpush1.bf16.msra.mxu0 %v458
    %555 = vmatprep.subr.bf16.mxu0 %v463
    %556 = vmatpush1.bf16.msra.mxu0 %v462
    %557 = vmatprep.subr.bf16.mxu0 %v467
    %558 = vmatpush1.bf16.msra.mxu0 %v466
    %559 = vmatprep.subr.bf16.mxu0 %v471
    %560 = vmatpush1.bf16.msra.mxu0 %v470
    %561 = vmatprep.subr.bf16.mxu0 %v475
    %562 = vmatpush1.bf16.msra.mxu0 %v474
    %563 = vmatprep.subr.bf16.mxu0 %v479
    %564 = vmatpush1.bf16.msra.mxu0 %v478
    %565 = vmatprep.subr.bf16.mxu0 %v483
    %566 = vmatpush1.bf16.msra.mxu0 %v482
    %567 = vmatprep.subr.bf16.mxu0 %v487
    %568 = vmatpush1.bf16.msra.mxu0 %v486
    %569 = vmatprep.subr.bf16.mxu0 %v491
    %570 = vmatpush1.bf16.msra.mxu0 %v490
    %571 = vmatprep.subr.bf16.mxu0 %v495
    %572 = vmatpush1.bf16.msra.mxu0 %v494
    %573 = vmatprep.subr.bf16.mxu0 %v499
    %574 = vmatpush1.bf16.msra.mxu0 %v498
    %575 = vmatprep.mubr.bf16.mxu0 %v309
    %576 = vmatmul.mubr.bf16.gmra.mrb[0].mxu0 %v308
    %v577 = vpop.f32.mrb[0].mxu0
    %v578 = vadd.f32 %v537, %v577
    %v579 = vpop.f32.mrb[0].mxu0
    %v580 = vadd.f32 %v539, %v579
    %v581 = vpop.f32.mrb[0].mxu0
    %v582 = vpop.f32.mrb[0].mxu0
    %583 = vdwg.mxu0
    %584 = vmatprep.subr.bf16.mxu0 %v377
    %585 = vmatpush1.bf16.msra.mxu0 %v376
    %586 = vmatprep.subr.bf16.mxu0 %v381
    %587 = vmatpush1.bf16.msra.mxu0 %v380
    %588 = vmatprep.subr.bf16.mxu0 %v385
    %589 = vmatpush1.bf16.msra.mxu0 %v384
    %590 = vmatprep.subr.bf16.mxu0 %v389
    %591 = vmatpush1.bf16.msra.mxu0 %v388
    %592 = vmatprep.subr.bf16.mxu0 %v393
    %593 = vmatpush1.bf16.msra.mxu0 %v392
    %594 = vmatprep.subr.bf16.mxu0 %v397
    %595 = vmatpush1.bf16.msra.mxu0 %v396
    %596 = vmatprep.subr.bf16.mxu0 %v401
    %597 = vmatpush1.bf16.msra.mxu0 %v400
    %598 = vmatprep.subr.bf16.mxu0 %v405
    %599 = vmatpush1.bf16.msra.mxu0 %v404
    %600 = vmatprep.subr.bf16.mxu0 %v409
    %601 = vmatpush1.bf16.msra.mxu0 %v408
    %602 = vmatprep.subr.bf16.mxu0 %v413
    %603 = vmatpush1.bf16.msra.mxu0 %v412
    %604 = vmatprep.subr.bf16.mxu0 %v417
    %605 = vmatpush1.bf16.msra.mxu0 %v416
    %606 = vmatprep.subr.bf16.mxu0 %v421
    %607 = vmatpush1.bf16.msra.mxu0 %v420
    %608 = vmatprep.subr.bf16.mxu0 %v425
    %609 = vmatpush1.bf16.msra.mxu0 %v424
    %610 = vmatprep.subr.bf16.mxu0 %v429
    %611 = vmatpush1.bf16.msra.mxu0 %v428
    %612 = vmatprep.subr.bf16.mxu0 %v433
    %613 = vmatpush1.bf16.msra.mxu0 %v432
    %614 = vmatprep.subr.bf16.mxu0 %v437
    %615 = vmatpush1.bf16.msra.mxu0 %v436
    %616 = vmatprep.mubr.bf16.mxu0 %v307
    %617 = vmatmul.mubr.bf16.gmra.mrb[0].mxu0 %v306
    %v618 = vpop.f32.mrb[0].mxu0
    %v619 = vadd.f32 0.0, %v618
    %v620 = vpop.f32.mrb[0].mxu0
    %v621 = vadd.f32 0.0, %v620
    %v622 = vpop.f32.mrb[0].mxu0
    %v623 = vpop.f32.mrb[0].mxu0
    %624 = vdwg.mxu0
    %625 = vmatprep.subr.bf16.mxu0 %v441
    %626 = vmatpush1.bf16.msra.mxu0 %v440
    %627 = vmatprep.subr.bf16.mxu0 %v445
    %628 = vmatpush1.bf16.msra.mxu0 %v444
    %629 = vmatprep.subr.bf16.mxu0 %v449
    %630 = vmatpush1.bf16.msra.mxu0 %v448
    %631 = vmatprep.subr.bf16.mxu0 %v453
    %632 = vmatpush1.bf16.msra.mxu0 %v452
    %633 = vmatprep.subr.bf16.mxu0 %v457
    %634 = vmatpush1.bf16.msra.mxu0 %v456
    %635 = vmatprep.subr.bf16.mxu0 %v461
    %636 = vmatpush1.bf16.msra.mxu0 %v460
    %637 = vmatprep.subr.bf16.mxu0 %v465
    %638 = vmatpush1.bf16.msra.mxu0 %v464
    %639 = vmatprep.subr.bf16.mxu0 %v469
    %640 = vmatpush1.bf16.msra.mxu0 %v468
    %641 = vmatprep.subr.bf16.mxu0 %v473
    %642 = vmatpush1.bf16.msra.mxu0 %v472
    %643 = vmatprep.subr.bf16.mxu0 %v477
    %644 = vmatpush1.bf16.msra.mxu0 %v476
    %645 = vmatprep.subr.bf16.mxu0 %v481
    %646 = vmatpush1.bf16.msra.mxu0 %v480
    %647 = vmatprep.subr.bf16.mxu0 %v485
    %648 = vmatpush1.bf16.msra.mxu0 %v484
    %649 = vmatprep.subr.bf16.mxu0 %v489
    %650 = vmatpush1.bf16.msra.mxu0 %v488
    %651 = vmatprep.subr.bf16.mxu0 %v493
    %652 = vmatpush1.bf16.msra.mxu0 %v492
    %653 = vmatprep.subr.bf16.mxu0 %v497
    %654 = vmatpush1.bf16.msra.mxu0 %v496
    %655 = vmatprep.subr.bf16.mxu0 %v501
    %656 = vmatpush1.bf16.msra.mxu0 %v500
    %657 = vmatprep.mubr.bf16.mxu0 %v309
    %658 = vmatmul.mubr.bf16.gmra.mrb[0].mxu0 %v308
    %v659 = vpop.f32.mrb[0].mxu0
    %v660 = vadd.f32 %v619, %v659
    %v661 = vpop.f32.mrb[0].mxu0
    %v662 = vadd.f32 %v621, %v661
    %v663 = vpop.f32.mrb[0].mxu0
    %v664 = vpop.f32.mrb[0].mxu0
    %665 = vdwg.mxu0
    %v666 = vld [vmem:[#allocation7] sm:$0xf]
    %v668 = vlaneseq
    %v669 = vshrl.u32 %v668, 7
    %v670 = vsub.s32 0, %v669
    %v671 = vrot.slane %v666, %v670
    %v672 = vlaneseq
    %v673 = vshrl.u32 %v672, 7
    %v674 = vsub.s32 1, %v673
    %v675 = vrot.slane %v666, %v674
    %v676 = vlaneseq
    %v677 = vshrl.u32 %v676, 7
    %v678 = vsub.s32 2, %v677
    %v679 = vrot.slane %v666, %v678
    %v680 = vlaneseq
    %v681 = vshrl.u32 %v680, 7
    %v682 = vsub.s32 3, %v681
    %v683 = vrot.slane %v666, %v682
    %v688 = vmul.f32 %v578, %v671
    %v689 = vmul.f32 %v580, %v675
    %v690 = vmul.f32 %v660, %v679
    %v691 = vmul.f32 %v662, %v683
    %v692 = vld [vmem:[#allocation8] sm:$0xf]
    %v694 = vlaneseq
    %v695 = vshrl.u32 %v694, 7
    %v696 = vsub.s32 0, %v695
    %v697 = vrot.slane %v692, %v696
    %v698 = vlaneseq
    %v699 = vshrl.u32 %v698, 7
    %v700 = vsub.s32 1, %v699
    %v701 = vrot.slane %v692, %v700
    %v702 = vlaneseq
    %v703 = vshrl.u32 %v702, 7
    %v704 = vsub.s32 2, %v703
    %v705 = vrot.slane %v692, %v704
    %v706 = vlaneseq
    %v707 = vshrl.u32 %v706, 7
    %v708 = vsub.s32 3, %v707
    %v709 = vrot.slane %v692, %v708
    %v714 = vadd.f32 %v688, %v697
    %v715 = vadd.f32 %v689, %v701
    %v716 = vadd.f32 %v690, %v705
    %v717 = vadd.f32 %v691, %v709
    %v718 = vmax.f32 %v714, 0.0
    %v719 = vmax.f32 %v715, 0.0
    %v720 = vmax.f32 %v716, 0.0
    %v721 = vmax.f32 %v717, 0.0
    %v722 = vpack.c.bf16 %v718, %v718
    %v723 = vpack.c.bf16 %v719, %v719
    %v724 = vpack.c.bf16 %v720, %v720
    %v725 = vpack.c.bf16 %v721, %v721
    %v726 = vld [vmem:[%s8] sm:$0xf]
    %v727 = vld [vmem:[%s8 + $0x4] sm:$0xf]
    %v728 = vld [vmem:[%s8 + $0x8] sm:$0xf]
    %v729 = vld [vmem:[%s8 + $0xc] sm:$0xf]
    %v730 = vld [vmem:[%s8 + $0x10] sm:$0xf]
    %v731 = vld [vmem:[%s8 + $0x14] sm:$0xf]
    %v732 = vld [vmem:[%s8 + $0x18] sm:$0xf]
    %v733 = vld [vmem:[%s8 + $0x1c] sm:$0xf]
    %v734 = vld [vmem:[%s8 + $0x20] sm:$0xf]
    %v735 = vld [vmem:[%s8 + $0x24] sm:$0xf]
    %v736 = vld [vmem:[%s8 + $0x28] sm:$0xf]
    %v737 = vld [vmem:[%s8 + $0x2c] sm:$0xf]
    %v738 = vld [vmem:[%s8 + $0x30] sm:$0xf]
    %v739 = vld [vmem:[%s8 + $0x34] sm:$0xf]
    %v740 = vld [vmem:[%s8 + $0x38] sm:$0xf]
    %v741 = vld [vmem:[%s8 + $0x3c] sm:$0xf]
    %v742 = vld [vmem:[%s8 + $0x40] sm:$0xf]
    %v743 = vld [vmem:[%s8 + $0x44] sm:$0xf]
    %v744 = vld [vmem:[%s8 + $0x48] sm:$0xf]
    %v745 = vld [vmem:[%s8 + $0x4c] sm:$0xf]
    %v746 = vld [vmem:[%s8 + $0x50] sm:$0xf]
    %v747 = vld [vmem:[%s8 + $0x54] sm:$0xf]
    %v748 = vld [vmem:[%s8 + $0x58] sm:$0xf]
    %v749 = vld [vmem:[%s8 + $0x5c] sm:$0xf]
    %v750 = vld [vmem:[%s8 + $0x60] sm:$0xf]
    %v751 = vld [vmem:[%s8 + $0x64] sm:$0xf]
    %v752 = vld [vmem:[%s8 + $0x68] sm:$0xf]
    %v753 = vld [vmem:[%s8 + $0x6c] sm:$0xf]
    %v754 = vld [vmem:[%s8 + $0x70] sm:$0xf]
    %v755 = vld [vmem:[%s8 + $0x74] sm:$0xf]
    %v756 = vld [vmem:[%s8 + $0x78] sm:$0xf]
    %v757 = vld [vmem:[%s8 + $0x7c] sm:$0xf]
    %v758 = vld [vmem:[%s8 + $0x80] sm:$0xf]
    %v759 = vld [vmem:[%s8 + $0x84] sm:$0xf]
    %v760 = vld [vmem:[%s8 + $0x88] sm:$0xf]
    %v761 = vld [vmem:[%s8 + $0x8c] sm:$0xf]
    %v762 = vld [vmem:[%s8 + $0x90] sm:$0xf]
    %v763 = vld [vmem:[%s8 + $0x94] sm:$0xf]
    %v764 = vld [vmem:[%s8 + $0x98] sm:$0xf]
    %v765 = vld [vmem:[%s8 + $0x9c] sm:$0xf]
    %v766 = vld [vmem:[%s8 + $0xa0] sm:$0xf]
    %v767 = vld [vmem:[%s8 + $0xa4] sm:$0xf]
    %v768 = vld [vmem:[%s8 + $0xa8] sm:$0xf]
    %v769 = vld [vmem:[%s8 + $0xac] sm:$0xf]
    %v770 = vld [vmem:[%s8 + $0xb0] sm:$0xf]
    %v771 = vld [vmem:[%s8 + $0xb4] sm:$0xf]
    %v772 = vld [vmem:[%s8 + $0xb8] sm:$0xf]
    %v773 = vld [vmem:[%s8 + $0xbc] sm:$0xf]
    %v774 = vld [vmem:[%s8 + $0xc0] sm:$0xf]
    %v775 = vld [vmem:[%s8 + $0xc4] sm:$0xf]
    %v776 = vld [vmem:[%s8 + $0xc8] sm:$0xf]
    %v777 = vld [vmem:[%s8 + $0xcc] sm:$0xf]
    %v778 = vld [vmem:[%s8 + $0xd0] sm:$0xf]
    %v779 = vld [vmem:[%s8 + $0xd4] sm:$0xf]
    %v780 = vld [vmem:[%s8 + $0xd8] sm:$0xf]
    %v781 = vld [vmem:[%s8 + $0xdc] sm:$0xf]
    %v782 = vld [vmem:[%s8 + $0xe0] sm:$0xf]
    %v783 = vld [vmem:[%s8 + $0xe4] sm:$0xf]
    %v784 = vld [vmem:[%s8 + $0xe8] sm:$0xf]
    %v785 = vld [vmem:[%s8 + $0xec] sm:$0xf]
    %v786 = vld [vmem:[%s8 + $0xf0] sm:$0xf]
    %v787 = vld [vmem:[%s8 + $0xf4] sm:$0xf]
    %v788 = vld [vmem:[%s8 + $0xf8] sm:$0xf]
    %v789 = vld [vmem:[%s8 + $0xfc] sm:$0xf]
    %v790 = vld [vmem:[%s9] sm:$0x1]
    %v792 = vlaneseq
    %v793 = vshrl.u32 %v792, 7
    %v794 = vsub.s32 0, %v793
    %v795 = vrot.slane %v790, %v794
    %v861 = vunpack.c.l.b16 %v726
    %v862 = vunpack.c.l.b16 %v727
    %v863 = vunpack.c.l.b16 %v728
    %v864 = vunpack.c.l.b16 %v729
    %v865 = vunpack.c.l.b16 %v730
    %v866 = vunpack.c.l.b16 %v731
    %v867 = vunpack.c.l.b16 %v732
    %v868 = vunpack.c.l.b16 %v733
    %v869 = vunpack.c.l.b16 %v734
    %v870 = vunpack.c.l.b16 %v735
    %v871 = vunpack.c.l.b16 %v736
    %v872 = vunpack.c.l.b16 %v737
    %v873 = vunpack.c.l.b16 %v738
    %v874 = vunpack.c.l.b16 %v739
    %v875 = vunpack.c.l.b16 %v740
    %v876 = vunpack.c.l.b16 %v741
    %v877 = vunpack.c.l.b16 %v742
    %v878 = vunpack.c.l.b16 %v743
    %v879 = vunpack.c.l.b16 %v744
    %v880 = vunpack.c.l.b16 %v745
    %v881 = vunpack.c.l.b16 %v746
    %v882 = vunpack.c.l.b16 %v747
    %v883 = vunpack.c.l.b16 %v748
    %v884 = vunpack.c.l.b16 %v749
    %v885 = vunpack.c.l.b16 %v750
    %v886 = vunpack.c.l.b16 %v751
    %v887 = vunpack.c.l.b16 %v752
    %v888 = vunpack.c.l.b16 %v753
    %v889 = vunpack.c.l.b16 %v754
    %v890 = vunpack.c.l.b16 %v755
    %v891 = vunpack.c.l.b16 %v756
    %v892 = vunpack.c.l.b16 %v757
    %v893 = vunpack.c.l.b16 %v758
    %v894 = vunpack.c.l.b16 %v759
    %v895 = vunpack.c.l.b16 %v760
    %v896 = vunpack.c.l.b16 %v761
    %v897 = vunpack.c.l.b16 %v762
    %v898 = vunpack.c.l.b16 %v763
    %v899 = vunpack.c.l.b16 %v764
    %v900 = vunpack.c.l.b16 %v765
    %v901 = vunpack.c.l.b16 %v766
    %v902 = vunpack.c.l.b16 %v767
    %v903 = vunpack.c.l.b16 %v768
    %v904 = vunpack.c.l.b16 %v769
    %v905 = vunpack.c.l.b16 %v770
    %v906 = vunpack.c.l.b16 %v771
    %v907 = vunpack.c.l.b16 %v772
    %v908 = vunpack.c.l.b16 %v773
    %v909 = vunpack.c.l.b16 %v774
    %v910 = vunpack.c.l.b16 %v775
    %v911 = vunpack.c.l.b16 %v776
    %v912 = vunpack.c.l.b16 %v777
    %v913 = vunpack.c.l.b16 %v778
    %v914 = vunpack.c.l.b16 %v779
    %v915 = vunpack.c.l.b16 %v780
    %v916 = vunpack.c.l.b16 %v781
    %v917 = vunpack.c.l.b16 %v782
    %v918 = vunpack.c.l.b16 %v783
    %v919 = vunpack.c.l.b16 %v784
    %v920 = vunpack.c.l.b16 %v785
    %v921 = vunpack.c.l.b16 %v786
    %v922 = vunpack.c.l.b16 %v787
    %v923 = vunpack.c.l.b16 %v788
    %v924 = vunpack.c.l.b16 %v789
    %v925 = vpack.c.b16 %v862, %v861
    %v926 = vpack.c.b16 %v864, %v863
    %v927 = vpack.c.b16 %v866, %v865
    %v928 = vpack.c.b16 %v868, %v867
    %v929 = vpack.c.b16 %v870, %v869
    %v930 = vpack.c.b16 %v872, %v871
    %v931 = vpack.c.b16 %v874, %v873
    %v932 = vpack.c.b16 %v876, %v875
    %v933 = vpack.c.b16 %v878, %v877
    %v934 = vpack.c.b16 %v880, %v879
    %v935 = vpack.c.b16 %v882, %v881
    %v936 = vpack.c.b16 %v884, %v883
    %v937 = vpack.c.b16 %v886, %v885
    %v938 = vpack.c.b16 %v888, %v887
    %v939 = vpack.c.b16 %v890, %v889
    %v940 = vpack.c.b16 %v892, %v891
    %v941 = vpack.c.b16 %v894, %v893
    %v942 = vpack.c.b16 %v896, %v895
    %v943 = vpack.c.b16 %v898, %v897
    %v944 = vpack.c.b16 %v900, %v899
    %v945 = vpack.c.b16 %v902, %v901
    %v946 = vpack.c.b16 %v904, %v903
    %v947 = vpack.c.b16 %v906, %v905
    %v948 = vpack.c.b16 %v908, %v907
    %v949 = vpack.c.b16 %v910, %v909
    %v950 = vpack.c.b16 %v912, %v911
    %v951 = vpack.c.b16 %v914, %v913
    %v952 = vpack.c.b16 %v916, %v915
    %v953 = vpack.c.b16 %v918, %v917
    %v954 = vpack.c.b16 %v920, %v919
    %v955 = vpack.c.b16 %v922, %v921
    %v956 = vpack.c.b16 %v924, %v923
    %989 = vmatprep.subr.bf16.mxu0 0
    %990 = vmatpush1.bf16.msra.mxu0 %v925
    %991 = vmatprep.subr.bf16.mxu0 0
    %992 = vmatpush1.bf16.msra.mxu0 %v926
    %993 = vmatprep.subr.bf16.mxu0 0
    %994 = vmatpush1.bf16.msra.mxu0 %v927
    %995 = vmatprep.subr.bf16.mxu0 0
    %996 = vmatpush1.bf16.msra.mxu0 %v928
    %997 = vmatprep.subr.bf16.mxu0 0
    %998 = vmatpush1.bf16.msra.mxu0 %v929
    %999 = vmatprep.subr.bf16.mxu0 0
    %1000 = vmatpush1.bf16.msra.mxu0 %v930
    %1001 = vmatprep.subr.bf16.mxu0 0
    %1002 = vmatpush1.bf16.msra.mxu0 %v931
    %1003 = vmatprep.subr.bf16.mxu0 0
    %1004 = vmatpush1.bf16.msra.mxu0 %v932
    %1005 = vmatprep.subr.bf16.mxu0 0
    %1006 = vmatpush1.bf16.msra.mxu0 %v933
    %1007 = vmatprep.subr.bf16.mxu0 0
    %1008 = vmatpush1.bf16.msra.mxu0 %v934
    %1009 = vmatprep.subr.bf16.mxu0 0
    %1010 = vmatpush1.bf16.msra.mxu0 %v935
    %1011 = vmatprep.subr.bf16.mxu0 0
    %1012 = vmatpush1.bf16.msra.mxu0 %v936
    %1013 = vmatprep.subr.bf16.mxu0 0
    %1014 = vmatpush1.bf16.msra.mxu0 %v937
    %1015 = vmatprep.subr.bf16.mxu0 0
    %1016 = vmatpush1.bf16.msra.mxu0 %v938
    %1017 = vmatprep.subr.bf16.mxu0 0
    %1018 = vmatpush1.bf16.msra.mxu0 %v939
    %1019 = vmatprep.subr.bf16.mxu0 0
    %1020 = vmatpush1.bf16.msra.mxu0 %v940
    %1021 = vmatprep.mubr.bf16.mxu0 %v723
    %1022 = vmatmul.mubr.bf16.gmra.mrb[0].mxu0 %v722
    %v1023 = vpop.f32.mrb[0].mxu0
    %v1024 = vadd.f32 %v795, %v1023
    %v1025 = vpop.f32.mrb[0].mxu0
    %v1026 = vpop.f32.mrb[0].mxu0
    %v1027 = vpop.f32.mrb[0].mxu0
    %1028 = vdwg.mxu0
    %1029 = vmatprep.subr.bf16.mxu0 0
    %1030 = vmatpush1.bf16.msra.mxu0 %v941
    %1031 = vmatprep.subr.bf16.mxu0 0
    %1032 = vmatpush1.bf16.msra.mxu0 %v942
    %1033 = vmatprep.subr.bf16.mxu0 0
    %1034 = vmatpush1.bf16.msra.mxu0 %v943
    %1035 = vmatprep.subr.bf16.mxu0 0
    %1036 = vmatpush1.bf16.msra.mxu0 %v944
    %1037 = vmatprep.subr.bf16.mxu0 0
    %1038 = vmatpush1.bf16.msra.mxu0 %v945
    %1039 = vmatprep.subr.bf16.mxu0 0
    %1040 = vmatpush1.bf16.msra.mxu0 %v946
    %1041 = vmatprep.subr.bf16.mxu0 0
    %1042 = vmatpush1.bf16.msra.mxu0 %v947
    %1043 = vmatprep.subr.bf16.mxu0 0
    %1044 = vmatpush1.bf16.msra.mxu0 %v948
    %1045 = vmatprep.subr.bf16.mxu0 0
    %1046 = vmatpush1.bf16.msra.mxu0 %v949
    %1047 = vmatprep.subr.bf16.mxu0 0
    %1048 = vmatpush1.bf16.msra.mxu0 %v950
    %1049 = vmatprep.subr.bf16.mxu0 0
    %1050 = vmatpush1.bf16.msra.mxu0 %v951
    %1051 = vmatprep.subr.bf16.mxu0 0
    %1052 = vmatpush1.bf16.msra.mxu0 %v952
    %1053 = vmatprep.subr.bf16.mxu0 0
    %1054 = vmatpush1.bf16.msra.mxu0 %v953
    %1055 = vmatprep.subr.bf16.mxu0 0
    %1056 = vmatpush1.bf16.msra.mxu0 %v954
    %1057 = vmatprep.subr.bf16.mxu0 0
    %1058 = vmatpush1.bf16.msra.mxu0 %v955
    %1059 = vmatprep.subr.bf16.mxu0 0
    %1060 = vmatpush1.bf16.msra.mxu0 %v956
    %1061 = vmatprep.mubr.bf16.mxu0 %v725
    %1062 = vmatmul.mubr.bf16.gmra.mrb[0].mxu0 %v724
    %v1063 = vpop.f32.mrb[0].mxu0
    %v1064 = vadd.f32 %v1024, %v1063
    %v1065 = vpop.f32.mrb[0].mxu0
    %v1066 = vpop.f32.mrb[0].mxu0
    %v1067 = vpop.f32.mrb[0].mxu0
    %1068 = vdwg.mxu0
    %v1069 = vpack.c.bf16 %v1064, %v1064
    %v1070 = vld [vmem:[#allocation10] sm:$0xff]
    %v1071 = vld [vmem:[#allocation10 + $0x8] sm:$0xff]
    %v1072 = vld [vmem:[#allocation10 + $0x10] sm:$0xff]
    %v1073 = vld [vmem:[#allocation10 + $0x18] sm:$0xff]
    %v1074 = vld [vmem:[%s11] sm:$0xf]
    %v1076 = vlaneseq
    %v1077 = vshrl.u32 %v1076, 7
    %v1078 = vsub.s32 0, %v1077
    %v1079 = vrot.slane %v1074, %v1078
    %v1080 = vlaneseq
    %v1081 = vshrl.u32 %v1080, 7
    %v1082 = vsub.s32 1, %v1081
    %v1083 = vrot.slane %v1074, %v1082
    %v1084 = vlaneseq
    %v1085 = vshrl.u32 %v1084, 7
    %v1086 = vsub.s32 2, %v1085
    %v1087 = vrot.slane %v1074, %v1086
    %v1088 = vlaneseq
    %v1089 = vshrl.u32 %v1088, 7
    %v1090 = vsub.s32 3, %v1089
    %v1091 = vrot.slane %v1074, %v1090
    %v1100 = vunpack.c.l.b16 %v1070
    %v1101 = vunpack.c.h.b16 %v1070
    %v1102 = vunpack.c.l.b16 %v1071
    %v1103 = vunpack.c.h.b16 %v1071
    %v1104 = vunpack.c.l.b16 %v1072
    %v1105 = vunpack.c.h.b16 %v1072
    %v1106 = vunpack.c.l.b16 %v1073
    %v1107 = vunpack.c.h.b16 %v1073
    %v1108 = vpack.c.b16 %v1104, %v1100
    %v1109 = vpack.c.b16 %v1105, %v1101
    %v1110 = vpack.c.b16 %v1106, %v1102
    %v1111 = vpack.c.b16 %v1107, %v1103
    %v1117 = vsel %vm190, %v1069, 0
    %1119 = vmatprep.subr.bf16.mxu0 %v1109
    %1120 = vmatpush1.bf16.msra.mxu0 %v1108
    %1121 = vmatprep.subr.bf16.mxu0 0
    %1122 = vmatpush1.bf16.msra.mxu0 0
    %1123 = vmatprep.subr.bf16.mxu0 0
    %1124 = vmatpush1.bf16.msra.mxu0 0
    %1125 = vmatprep.subr.bf16.mxu0 0
    %1126 = vmatpush1.bf16.msra.mxu0 0
    %1127 = vmatprep.subr.bf16.mxu0 0
    %1128 = vmatpush1.bf16.msra.mxu0 0
    %1129 = vmatprep.subr.bf16.mxu0 0
    %1130 = vmatpush1.bf16.msra.mxu0 0
    %1131 = vmatprep.subr.bf16.mxu0 0
    %1132 = vmatpush1.bf16.msra.mxu0 0
    %1133 = vmatprep.subr.bf16.mxu0 0
    %1134 = vmatpush1.bf16.msra.mxu0 0
    %1135 = vmatprep.subr.bf16.mxu0 0
    %1136 = vmatpush1.bf16.msra.mxu0 0
    %1137 = vmatprep.subr.bf16.mxu0 0
    %1138 = vmatpush1.bf16.msra.mxu0 0
    %1139 = vmatprep.subr.bf16.mxu0 0
    %1140 = vmatpush1.bf16.msra.mxu0 0
    %1141 = vmatprep.subr.bf16.mxu0 0
    %1142 = vmatpush1.bf16.msra.mxu0 0
    %1143 = vmatprep.subr.bf16.mxu0 0
    %1144 = vmatpush1.bf16.msra.mxu0 0
    %1145 = vmatprep.subr.bf16.mxu0 0
    %1146 = vmatpush1.bf16.msra.mxu0 0
    %1147 = vmatprep.subr.bf16.mxu0 0
    %1148 = vmatpush1.bf16.msra.mxu0 0
    %1149 = vmatprep.subr.bf16.mxu0 0
    %1150 = vmatpush1.bf16.msra.mxu0 0
    %1151 = vmatprep.mubr.bf16.mxu0 0
    %1152 = vmatmul.mubr.bf16.gmra.mrb[0].mxu0 %v1117
    %v1153 = vpop.f32.mrb[0].mxu0
    %v1154 = vadd.f32 %v1079, %v1153
    %v1155 = vpop.f32.mrb[0].mxu0
    %v1156 = vadd.f32 %v1083, %v1155
    %v1157 = vpop.f32.mrb[0].mxu0
    %v1158 = vpop.f32.mrb[0].mxu0
    %1159 = vdwg.mxu0
    %1160 = vmatprep.subr.bf16.mxu0 %v1111
    %1161 = vmatpush1.bf16.msra.mxu0 %v1110
    %1162 = vmatprep.subr.bf16.mxu0 0
    %1163 = vmatpush1.bf16.msra.mxu0 0
    %1164 = vmatprep.subr.bf16.mxu0 0
    %1165 = vmatpush1.bf16.msra.mxu0 0
    %1166 = vmatprep.subr.bf16.mxu0 0
    %1167 = vmatpush1.bf16.msra.mxu0 0
    %1168 = vmatprep.subr.bf16.mxu0 0
    %1169 = vmatpush1.bf16.msra.mxu0 0
    %1170 = vmatprep.subr.bf16.mxu0 0
    %1171 = vmatpush1.bf16.msra.mxu0 0
    %1172 = vmatprep.subr.bf16.mxu0 0
    %1173 = vmatpush1.bf16.msra.mxu0 0
    %1174 = vmatprep.subr.bf16.mxu0 0
    %1175 = vmatpush1.bf16.msra.mxu0 0
    %1176 = vmatprep.subr.bf16.mxu0 0
    %1177 = vmatpush1.bf16.msra.mxu0 0
    %1178 = vmatprep.subr.bf16.mxu0 0
    %1179 = vmatpush1.bf16.msra.mxu0 0
    %1180 = vmatprep.subr.bf16.mxu0 0
    %1181 = vmatpush1.bf16.msra.mxu0 0
    %1182 = vmatprep.subr.bf16.mxu0 0
    %1183 = vmatpush1.bf16.msra.mxu0 0
    %1184 = vmatprep.subr.bf16.mxu0 0
    %1185 = vmatpush1.bf16.msra.mxu0 0
    %1186 = vmatprep.subr.bf16.mxu0 0
    %1187 = vmatpush1.bf16.msra.mxu0 0
    %1188 = vmatprep.subr.bf16.mxu0 0
    %1189 = vmatpush1.bf16.msra.mxu0 0
    %1190 = vmatprep.subr.bf16.mxu0 0
    %1191 = vmatpush1.bf16.msra.mxu0 0
    %1192 = vmatprep.mubr.bf16.mxu0 0
    %1193 = vmatmul.mubr.bf16.gmra.mrb[0].mxu0 %v1117
    %v1194 = vpop.f32.mrb[0].mxu0
    %v1195 = vadd.f32 %v1087, %v1194
    %v1196 = vpop.f32.mrb[0].mxu0
    %v1197 = vadd.f32 %v1091, %v1196
    %v1198 = vpop.f32.mrb[0].mxu0
    %v1199 = vpop.f32.mrb[0].mxu0
    %1200 = vdwg.mxu0
    %v1201 = vmax.f32 %v1154, 0.0
    %v1202 = vmax.f32 %v1156, 0.0
    %v1203 = vmax.f32 %v1195, 0.0
    %v1204 = vmax.f32 %v1197, 0.0
    %v1205 = vpack.c.bf16 %v1201, %v1201
    %v1206 = vpack.c.bf16 %v1202, %v1202
    %v1207 = vpack.c.bf16 %v1203, %v1203
    %v1208 = vpack.c.bf16 %v1204, %v1204
    %v1209 = vld [vmem:[#allocation11] sm:$0xff]
    %v1210 = vld [vmem:[#allocation11 + $0x8] sm:$0xff]
    %v1211 = vld [vmem:[#allocation11 + $0x10] sm:$0xff]
    %v1212 = vld [vmem:[#allocation11 + $0x18] sm:$0xff]
    %v1213 = vld [vmem:[#allocation11 + $0x20] sm:$0xff]
    %v1214 = vld [vmem:[#allocation11 + $0x28] sm:$0xff]
    %v1215 = vld [vmem:[#allocation11 + $0x30] sm:$0xff]
    %v1216 = vld [vmem:[#allocation11 + $0x38] sm:$0xff]
    %v1217 = vld [vmem:[#allocation11 + $0x40] sm:$0xff]
    %v1218 = vld [vmem:[#allocation11 + $0x48] sm:$0xff]
    %v1219 = vld [vmem:[#allocation11 + $0x50] sm:$0xff]
    %v1220 = vld [vmem:[#allocation11 + $0x58] sm:$0xff]
    %v1221 = vld [vmem:[#allocation11 + $0x60] sm:$0xff]
    %v1222 = vld [vmem:[#allocation11 + $0x68] sm:$0xff]
    %v1223 = vld [vmem:[#allocation11 + $0x70] sm:$0xff]
    %v1224 = vld [vmem:[#allocation11 + $0x78] sm:$0xff]
    %v1225 = vld [vmem:[#allocation11 + $0x80] sm:$0xff]
    %v1226 = vld [vmem:[#allocation11 + $0x88] sm:$0xff]
    %v1227 = vld [vmem:[#allocation11 + $0x90] sm:$0xff]
    %v1228 = vld [vmem:[#allocation11 + $0x98] sm:$0xff]
    %v1229 = vld [vmem:[#allocation11 + $0xa0] sm:$0xff]
    %v1230 = vld [vmem:[#allocation11 + $0xa8] sm:$0xff]
    %v1231 = vld [vmem:[#allocation11 + $0xb0] sm:$0xff]
    %v1232 = vld [vmem:[#allocation11 + $0xb8] sm:$0xff]
    %v1233 = vld [vmem:[#allocation11 + $0xc0] sm:$0xff]
    %v1234 = vld [vmem:[#allocation11 + $0xc8] sm:$0xff]
    %v1235 = vld [vmem:[#allocation11 + $0xd0] sm:$0xff]
    %v1236 = vld [vmem:[#allocation11 + $0xd8] sm:$0xff]
    %v1237 = vld [vmem:[#allocation11 + $0xe0] sm:$0xff]
    %v1238 = vld [vmem:[#allocation11 + $0xe8] sm:$0xff]
    %v1239 = vld [vmem:[#allocation11 + $0xf0] sm:$0xff]
    %v1240 = vld [vmem:[#allocation11 + $0xf8] sm:$0xff]
    %v1241 = vld [vmem:[#allocation11 + $0x100] sm:$0xff]
    %v1242 = vld [vmem:[#allocation11 + $0x108] sm:$0xff]
    %v1243 = vld [vmem:[#allocation11 + $0x110] sm:$0xff]
    %v1244 = vld [vmem:[#allocation11 + $0x118] sm:$0xff]
    %v1245 = vld [vmem:[#allocation11 + $0x120] sm:$0xff]
    %v1246 = vld [vmem:[#allocation11 + $0x128] sm:$0xff]
    %v1247 = vld [vmem:[#allocation11 + $0x130] sm:$0xff]
    %v1248 = vld [vmem:[#allocation11 + $0x138] sm:$0xff]
    %v1249 = vld [vmem:[#allocation11 + $0x140] sm:$0xff]
    %v1250 = vld [vmem:[#allocation11 + $0x148] sm:$0xff]
    %v1251 = vld [vmem:[#allocation11 + $0x150] sm:$0xff]
    %v1252 = vld [vmem:[#allocation11 + $0x158] sm:$0xff]
    %v1253 = vld [vmem:[#allocation11 + $0x160] sm:$0xff]
    %v1254 = vld [vmem:[#allocation11 + $0x168] sm:$0xff]
    %v1255 = vld [vmem:[#allocation11 + $0x170] sm:$0xff]
    %v1256 = vld [vmem:[#allocation11 + $0x178] sm:$0xff]
    %v1257 = vld [vmem:[#allocation11 + $0x180] sm:$0xff]
    %v1258 = vld [vmem:[#allocation11 + $0x188] sm:$0xff]
    %v1259 = vld [vmem:[#allocation11 + $0x190] sm:$0xff]
    %v1260 = vld [vmem:[#allocation11 + $0x198] sm:$0xff]
    %v1261 = vld [vmem:[#allocation11 + $0x1a0] sm:$0xff]
    %v1262 = vld [vmem:[#allocation11 + $0x1a8] sm:$0xff]
    %v1263 = vld [vmem:[#allocation11 + $0x1b0] sm:$0xff]
    %v1264 = vld [vmem:[#allocation11 + $0x1b8] sm:$0xff]
    %v1265 = vld [vmem:[#allocation11 + $0x1c0] sm:$0xff]
    %v1266 = vld [vmem:[#allocation11 + $0x1c8] sm:$0xff]
    %v1267 = vld [vmem:[#allocation11 + $0x1d0] sm:$0xff]
    %v1268 = vld [vmem:[#allocation11 + $0x1d8] sm:$0xff]
    %v1269 = vld [vmem:[#allocation11 + $0x1e0] sm:$0xff]
    %v1270 = vld [vmem:[#allocation11 + $0x1e8] sm:$0xff]
    %v1271 = vld [vmem:[#allocation11 + $0x1f0] sm:$0xff]
    %v1272 = vld [vmem:[#allocation11 + $0x1f8] sm:$0xff]
    %v1273 = vunpack.c.l.s8.bf16 %v1209
    %v1274 = vunpack.c.l.s8.bf16 %v1210
    %v1275 = vunpack.c.l.s8.bf16 %v1211
    %v1276 = vunpack.c.l.s8.bf16 %v1212
    %v1277 = vunpack.c.h.s8.bf16 %v1209
    %v1278 = vunpack.c.h.s8.bf16 %v1210
    %v1279 = vunpack.c.h.s8.bf16 %v1211
    %v1280 = vunpack.c.h.s8.bf16 %v1212
    %v1281 = vunpack.c.l.s8.bf16 %v1213
    %v1282 = vunpack.c.l.s8.bf16 %v1214
    %v1283 = vunpack.c.l.s8.bf16 %v1215
    %v1284 = vunpack.c.l.s8.bf16 %v1216
    %v1285 = vunpack.c.h.s8.bf16 %v1213
    %v1286 = vunpack.c.h.s8.bf16 %v1214
    %v1287 = vunpack.c.h.s8.bf16 %v1215
    %v1288 = vunpack.c.h.s8.bf16 %v1216
    %v1289 = vunpack.c.l.s8.bf16 %v1217
    %v1290 = vunpack.c.l.s8.bf16 %v1218
    %v1291 = vunpack.c.l.s8.bf16 %v1219
    %v1292 = vunpack.c.l.s8.bf16 %v1220
    %v1293 = vunpack.c.h.s8.bf16 %v1217
    %v1294 = vunpack.c.h.s8.bf16 %v1218
    %v1295 = vunpack.c.h.s8.bf16 %v1219
    %v1296 = vunpack.c.h.s8.bf16 %v1220
    %v1297 = vunpack.c.l.s8.bf16 %v1221
    %v1298 = vunpack.c.l.s8.bf16 %v1222
    %v1299 = vunpack.c.l.s8.bf16 %v1223
    %v1300 = vunpack.c.l.s8.bf16 %v1224
    %v1301 = vunpack.c.h.s8.bf16 %v1221
    %v1302 = vunpack.c.h.s8.bf16 %v1222
    %v1303 = vunpack.c.h.s8.bf16 %v1223
    %v1304 = vunpack.c.h.s8.bf16 %v1224
    %v1305 = vunpack.c.l.s8.bf16 %v1225
    %v1306 = vunpack.c.l.s8.bf16 %v1226
    %v1307 = vunpack.c.l.s8.bf16 %v1227
    %v1308 = vunpack.c.l.s8.bf16 %v1228
    %v1309 = vunpack.c.h.s8.bf16 %v1225
    %v1310 = vunpack.c.h.s8.bf16 %v1226
    %v1311 = vunpack.c.h.s8.bf16 %v1227
    %v1312 = vunpack.c.h.s8.bf16 %v1228
    %v1313 = vunpack.c.l.s8.bf16 %v1229
    %v1314 = vunpack.c.l.s8.bf16 %v1230
    %v1315 = vunpack.c.l.s8.bf16 %v1231
    %v1316 = vunpack.c.l.s8.bf16 %v1232
    %v1317 = vunpack.c.h.s8.bf16 %v1229
    %v1318 = vunpack.c.h.s8.bf16 %v1230
    %v1319 = vunpack.c.h.s8.bf16 %v1231
    %v1320 = vunpack.c.h.s8.bf16 %v1232
    %v1321 = vunpack.c.l.s8.bf16 %v1233
    %v1322 = vunpack.c.l.s8.bf16 %v1234
    %v1323 = vunpack.c.l.s8.bf16 %v1235
    %v1324 = vunpack.c.l.s8.bf16 %v1236
    %v1325 = vunpack.c.h.s8.bf16 %v1233
    %v1326 = vunpack.c.h.s8.bf16 %v1234
    %v1327 = vunpack.c.h.s8.bf16 %v1235
    %v1328 = vunpack.c.h.s8.bf16 %v1236
    %v1329 = vunpack.c.l.s8.bf16 %v1237
    %v1330 = vunpack.c.l.s8.bf16 %v1238
    %v1331 = vunpack.c.l.s8.bf16 %v1239
    %v1332 = vunpack.c.l.s8.bf16 %v1240
    %v1333 = vunpack.c.h.s8.bf16 %v1237
    %v1334 = vunpack.c.h.s8.bf16 %v1238
    %v1335 = vunpack.c.h.s8.bf16 %v1239
    %v1336 = vunpack.c.h.s8.bf16 %v1240
    %v1337 = vunpack.c.l.s8.bf16 %v1241
    %v1338 = vunpack.c.l.s8.bf16 %v1242
    %v1339 = vunpack.c.l.s8.bf16 %v1243
    %v1340 = vunpack.c.l.s8.bf16 %v1244
    %v1341 = vunpack.c.h.s8.bf16 %v1241
    %v1342 = vunpack.c.h.s8.bf16 %v1242
    %v1343 = vunpack.c.h.s8.bf16 %v1243
    %v1344 = vunpack.c.h.s8.bf16 %v1244
    %v1345 = vunpack.c.l.s8.bf16 %v1245
    %v1346 = vunpack.c.l.s8.bf16 %v1246
    %v1347 = vunpack.c.l.s8.bf16 %v1247
    %v1348 = vunpack.c.l.s8.bf16 %v1248
    %v1349 = vunpack.c.h.s8.bf16 %v1245
    %v1350 = vunpack.c.h.s8.bf16 %v1246
    %v1351 = vunpack.c.h.s8.bf16 %v1247
    %v1352 = vunpack.c.h.s8.bf16 %v1248
    %v1353 = vunpack.c.l.s8.bf16 %v1249
    %v1354 = vunpack.c.l.s8.bf16 %v1250
    %v1355 = vunpack.c.l.s8.bf16 %v1251
    %v1356 = vunpack.c.l.s8.bf16 %v1252
    %v1357 = vunpack.c.h.s8.bf16 %v1249
    %v1358 = vunpack.c.h.s8.bf16 %v1250
    %v1359 = vunpack.c.h.s8.bf16 %v1251
    %v1360 = vunpack.c.h.s8.bf16 %v1252
    %v1361 = vunpack.c.l.s8.bf16 %v1253
    %v1362 = vunpack.c.l.s8.bf16 %v1254
    %v1363 = vunpack.c.l.s8.bf16 %v1255
    %v1364 = vunpack.c.l.s8.bf16 %v1256
    %v1365 = vunpack.c.h.s8.bf16 %v1253
    %v1366 = vunpack.c.h.s8.bf16 %v1254
    %v1367 = vunpack.c.h.s8.bf16 %v1255
    %v1368 = vunpack.c.h.s8.bf16 %v1256
    %v1369 = vunpack.c.l.s8.bf16 %v1257
    %v1370 = vunpack.c.l.s8.bf16 %v1258
    %v1371 = vunpack.c.l.s8.bf16 %v1259
    %v1372 = vunpack.c.l.s8.bf16 %v1260
    %v1373 = vunpack.c.h.s8.bf16 %v1257
    %v1374 = vunpack.c.h.s8.bf16 %v1258
    %v1375 = vunpack.c.h.s8.bf16 %v1259
    %v1376 = vunpack.c.h.s8.bf16 %v1260
    %v1377 = vunpack.c.l.s8.bf16 %v1261
    %v1378 = vunpack.c.l.s8.bf16 %v1262
    %v1379 = vunpack.c.l.s8.bf16 %v1263
    %v1380 = vunpack.c.l.s8.bf16 %v1264
    %v1381 = vunpack.c.h.s8.bf16 %v1261
    %v1382 = vunpack.c.h.s8.bf16 %v1262
    %v1383 = vunpack.c.h.s8.bf16 %v1263
    %v1384 = vunpack.c.h.s8.bf16 %v1264
    %v1385 = vunpack.c.l.s8.bf16 %v1265
    %v1386 = vunpack.c.l.s8.bf16 %v1266
    %v1387 = vunpack.c.l.s8.bf16 %v1267
    %v1388 = vunpack.c.l.s8.bf16 %v1268
    %v1389 = vunpack.c.h.s8.bf16 %v1265
    %v1390 = vunpack.c.h.s8.bf16 %v1266
    %v1391 = vunpack.c.h.s8.bf16 %v1267
    %v1392 = vunpack.c.h.s8.bf16 %v1268
    %v1393 = vunpack.c.l.s8.bf16 %v1269
    %v1394 = vunpack.c.l.s8.bf16 %v1270
    %v1395 = vunpack.c.l.s8.bf16 %v1271
    %v1396 = vunpack.c.l.s8.bf16 %v1272
    %v1397 = vunpack.c.h.s8.bf16 %v1269
    %v1398 = vunpack.c.h.s8.bf16 %v1270
    %v1399 = vunpack.c.h.s8.bf16 %v1271
    %v1400 = vunpack.c.h.s8.bf16 %v1272
    %1401 = vmatprep.subr.bf16.mxu0 %v1274
    %1402 = vmatpush1.bf16.msra.mxu0 %v1273
    %1403 = vmatprep.subr.bf16.mxu0 %v1278
    %1404 = vmatpush1.bf16.msra.mxu0 %v1277
    %1405 = vmatprep.subr.bf16.mxu0 %v1282
    %1406 = vmatpush1.bf16.msra.mxu0 %v1281
    %1407 = vmatprep.subr.bf16.mxu0 %v1286
    %1408 = vmatpush1.bf16.msra.mxu0 %v1285
    %1409 = vmatprep.subr.bf16.mxu0 %v1290
    %1410 = vmatpush1.bf16.msra.mxu0 %v1289
    %1411 = vmatprep.subr.bf16.mxu0 %v1294
    %1412 = vmatpush1.bf16.msra.mxu0 %v1293
    %1413 = vmatprep.subr.bf16.mxu0 %v1298
    %1414 = vmatpush1.bf16.msra.mxu0 %v1297
    %1415 = vmatprep.subr.bf16.mxu0 %v1302
    %1416 = vmatpush1.bf16.msra.mxu0 %v1301
    %1417 = vmatprep.subr.bf16.mxu0 %v1306
    %1418 = vmatpush1.bf16.msra.mxu0 %v1305
    %1419 = vmatprep.subr.bf16.mxu0 %v1310
    %1420 = vmatpush1.bf16.msra.mxu0 %v1309
    %1421 = vmatprep.subr.bf16.mxu0 %v1314
    %1422 = vmatpush1.bf16.msra.mxu0 %v1313
    %1423 = vmatprep.subr.bf16.mxu0 %v1318
    %1424 = vmatpush1.bf16.msra.mxu0 %v1317
    %1425 = vmatprep.subr.bf16.mxu0 %v1322
    %1426 = vmatpush1.bf16.msra.mxu0 %v1321
    %1427 = vmatprep.subr.bf16.mxu0 %v1326
    %1428 = vmatpush1.bf16.msra.mxu0 %v1325
    %1429 = vmatprep.subr.bf16.mxu0 %v1330
    %1430 = vmatpush1.bf16.msra.mxu0 %v1329
    %1431 = vmatprep.subr.bf16.mxu0 %v1334
    %1432 = vmatpush1.bf16.msra.mxu0 %v1333
    %1433 = vmatprep.mubr.bf16.mxu0 %v1206
    %1434 = vmatmul.mubr.bf16.gmra.mrb[0].mxu0 %v1205
    %v1435 = vpop.f32.mrb[0].mxu0
    %v1436 = vadd.f32 0.0, %v1435
    %v1437 = vpop.f32.mrb[0].mxu0
    %v1438 = vadd.f32 0.0, %v1437
    %v1439 = vpop.f32.mrb[0].mxu0
    %v1440 = vpop.f32.mrb[0].mxu0
    %1441 = vdwg.mxu0
    %1442 = vmatprep.subr.bf16.mxu0 %v1338
    %1443 = vmatpush1.bf16.msra.mxu0 %v1337
    %1444 = vmatprep.subr.bf16.mxu0 %v1342
    %1445 = vmatpush1.bf16.msra.mxu0 %v1341
    %1446 = vmatprep.subr.bf16.mxu0 %v1346
    %1447 = vmatpush1.bf16.msra.mxu0 %v1345
    %1448 = vmatprep.subr.bf16.mxu0 %v1350
    %1449 = vmatpush1.bf16.msra.mxu0 %v1349
    %1450 = vmatprep.subr.bf16.mxu0 %v1354
    %1451 = vmatpush1.bf16.msra.mxu0 %v1353
    %1452 = vmatprep.subr.bf16.mxu0 %v1358
    %1453 = vmatpush1.bf16.msra.mxu0 %v1357
    %1454 = vmatprep.subr.bf16.mxu0 %v1362
    %1455 = vmatpush1.bf16.msra.mxu0 %v1361
    %1456 = vmatprep.subr.bf16.mxu0 %v1366
    %1457 = vmatpush1.bf16.msra.mxu0 %v1365
    %1458 = vmatprep.subr.bf16.mxu0 %v1370
    %1459 = vmatpush1.bf16.msra.mxu0 %v1369
    %1460 = vmatprep.subr.bf16.mxu0 %v1374
    %1461 = vmatpush1.bf16.msra.mxu0 %v1373
    %1462 = vmatprep.subr.bf16.mxu0 %v1378
    %1463 = vmatpush1.bf16.msra.mxu0 %v1377
    %1464 = vmatprep.subr.bf16.mxu0 %v1382
    %1465 = vmatpush1.bf16.msra.mxu0 %v1381
    %1466 = vmatprep.subr.bf16.mxu0 %v1386
    %1467 = vmatpush1.bf16.msra.mxu0 %v1385
    %1468 = vmatprep.subr.bf16.mxu0 %v1390
    %1469 = vmatpush1.bf16.msra.mxu0 %v1389
    %1470 = vmatprep.subr.bf16.mxu0 %v1394
    %1471 = vmatpush1.bf16.msra.mxu0 %v1393
    %1472 = vmatprep.subr.bf16.mxu0 %v1398
    %1473 = vmatpush1.bf16.msra.mxu0 %v1397
    %1474 = vmatprep.mubr.bf16.mxu0 %v1208
    %1475 = vmatmul.mubr.bf16.gmra.mrb[0].mxu0 %v1207
    %v1476 = vpop.f32.mrb[0].mxu0
    %v1477 = vadd.f32 %v1436, %v1476
    %v1478 = vpop.f32.mrb[0].mxu0
    %v1479 = vadd.f32 %v1438, %v1478
    %v1480 = vpop.f32.mrb[0].mxu0
    %v1481 = vpop.f32.mrb[0].mxu0
    %1482 = vdwg.mxu0
    %1483 = vmatprep.subr.bf16.mxu0 %v1276
    %1484 = vmatpush1.bf16.msra.mxu0 %v1275
    %1485 = vmatprep.subr.bf16.mxu0 %v1280
    %1486 = vmatpush1.bf16.msra.mxu0 %v1279
    %1487 = vmatprep.subr.bf16.mxu0 %v1284
    %1488 = vmatpush1.bf16.msra.mxu0 %v1283
    %1489 = vmatprep.subr.bf16.mxu0 %v1288
    %1490 = vmatpush1.bf16.msra.mxu0 %v1287
    %1491 = vmatprep.subr.bf16.mxu0 %v1292
    %1492 = vmatpush1.bf16.msra.mxu0 %v1291
    %1493 = vmatprep.subr.bf16.mxu0 %v1296
    %1494 = vmatpush1.bf16.msra.mxu0 %v1295
    %1495 = vmatprep.subr.bf16.mxu0 %v1300
    %1496 = vmatpush1.bf16.msra.mxu0 %v1299
    %1497 = vmatprep.subr.bf16.mxu0 %v1304
    %1498 = vmatpush1.bf16.msra.mxu0 %v1303
    %1499 = vmatprep.subr.bf16.mxu0 %v1308
    %1500 = vmatpush1.bf16.msra.mxu0 %v1307
    %1501 = vmatprep.subr.bf16.mxu0 %v1312
    %1502 = vmatpush1.bf16.msra.mxu0 %v1311
    %1503 = vmatprep.subr.bf16.mxu0 %v1316
    %1504 = vmatpush1.bf16.msra.mxu0 %v1315
    %1505 = vmatprep.subr.bf16.mxu0 %v1320
    %1506 = vmatpush1.bf16.msra.mxu0 %v1319
    %1507 = vmatprep.subr.bf16.mxu0 %v1324
    %1508 = vmatpush1.bf16.msra.mxu0 %v1323
    %1509 = vmatprep.subr.bf16.mxu0 %v1328
    %1510 = vmatpush1.bf16.msra.mxu0 %v1327
    %1511 = vmatprep.subr.bf16.mxu0 %v1332
    %1512 = vmatpush1.bf16.msra.mxu0 %v1331
    %1513 = vmatprep.subr.bf16.mxu0 %v1336
    %1514 = vmatpush1.bf16.msra.mxu0 %v1335
    %1515 = vmatprep.mubr.bf16.mxu0 %v1206
    %1516 = vmatmul.mubr.bf16.gmra.mrb[0].mxu0 %v1205
    %v1517 = vpop.f32.mrb[0].mxu0
    %v1518 = vadd.f32 0.0, %v1517
    %v1519 = vpop.f32.mrb[0].mxu0
    %v1520 = vadd.f32 0.0, %v1519
    %v1521 = vpop.f32.mrb[0].mxu0
    %v1522 = vpop.f32.mrb[0].mxu0
    %1523 = vdwg.mxu0
    %1524 = vmatprep.subr.bf16.mxu0 %v1340
    %1525 = vmatpush1.bf16.msra.mxu0 %v1339
    %1526 = vmatprep.subr.bf16.mxu0 %v1344
    %1527 = vmatpush1.bf16.msra.mxu0 %v1343
    %1528 = vmatprep.subr.bf16.mxu0 %v1348
    %1529 = vmatpush1.bf16.msra.mxu0 %v1347
    %1530 = vmatprep.subr.bf16.mxu0 %v1352
    %1531 = vmatpush1.bf16.msra.mxu0 %v1351
    %1532 = vmatprep.subr.bf16.mxu0 %v1356
    %1533 = vmatpush1.bf16.msra.mxu0 %v1355
    %1534 = vmatprep.subr.bf16.mxu0 %v1360
    %1535 = vmatpush1.bf16.msra.mxu0 %v1359
    %1536 = vmatprep.subr.bf16.mxu0 %v1364
    %1537 = vmatpush1.bf16.msra.mxu0 %v1363
    %1538 = vmatprep.subr.bf16.mxu0 %v1368
    %1539 = vmatpush1.bf16.msra.mxu0 %v1367
    %1540 = vmatprep.subr.bf16.mxu0 %v1372
    %1541 = vmatpush1.bf16.msra.mxu0 %v1371
    %1542 = vmatprep.subr.bf16.mxu0 %v1376
    %1543 = vmatpush1.bf16.msra.mxu0 %v1375
    %1544 = vmatprep.subr.bf16.mxu0 %v1380
    %1545 = vmatpush1.bf16.msra.mxu0 %v1379
    %1546 = vmatprep.subr.bf16.mxu0 %v1384
    %1547 = vmatpush1.bf16.msra.mxu0 %v1383
    %1548 = vmatprep.subr.bf16.mxu0 %v1388
    %1549 = vmatpush1.bf16.msra.mxu0 %v1387
    %1550 = vmatprep.subr.bf16.mxu0 %v1392
    %1551 = vmatpush1.bf16.msra.mxu0 %v1391
    %1552 = vmatprep.subr.bf16.mxu0 %v1396
    %1553 = vmatpush1.bf16.msra.mxu0 %v1395
    %1554 = vmatprep.subr.bf16.mxu0 %v1400
    %1555 = vmatpush1.bf16.msra.mxu0 %v1399
    %1556 = vmatprep.mubr.bf16.mxu0 %v1208
    %1557 = vmatmul.mubr.bf16.gmra.mrb[0].mxu0 %v1207
    %v1558 = vpop.f32.mrb[0].mxu0
    %v1559 = vadd.f32 %v1518, %v1558
    %v1560 = vpop.f32.mrb[0].mxu0
    %v1561 = vadd.f32 %v1520, %v1560
    %v1562 = vpop.f32.mrb[0].mxu0
    %v1563 = vpop.f32.mrb[0].mxu0
    %1564 = vdwg.mxu0
    %v1565 = vld [vmem:[%s13] sm:$0xf]
    %v1567 = vlaneseq
    %v1568 = vshrl.u32 %v1567, 7
    %v1569 = vsub.s32 0, %v1568
    %v1570 = vrot.slane %v1565, %v1569
    %v1571 = vlaneseq
    %v1572 = vshrl.u32 %v1571, 7
    %v1573 = vsub.s32 1, %v1572
    %v1574 = vrot.slane %v1565, %v1573
    %v1575 = vlaneseq
    %v1576 = vshrl.u32 %v1575, 7
    %v1577 = vsub.s32 2, %v1576
    %v1578 = vrot.slane %v1565, %v1577
    %v1579 = vlaneseq
    %v1580 = vshrl.u32 %v1579, 7
    %v1581 = vsub.s32 3, %v1580
    %v1582 = vrot.slane %v1565, %v1581
    %v1587 = vmul.f32 %v1477, %v1570
    %v1588 = vmul.f32 %v1479, %v1574
    %v1589 = vmul.f32 %v1559, %v1578
    %v1590 = vmul.f32 %v1561, %v1582
    %v1591 = vld [vmem:[%s14] sm:$0xf]
    %v1593 = vlaneseq
    %v1594 = vshrl.u32 %v1593, 7
    %v1595 = vsub.s32 0, %v1594
    %v1596 = vrot.slane %v1591, %v1595
    %v1597 = vlaneseq
    %v1598 = vshrl.u32 %v1597, 7
    %v1599 = vsub.s32 1, %v1598
    %v1600 = vrot.slane %v1591, %v1599
    %v1601 = vlaneseq
    %v1602 = vshrl.u32 %v1601, 7
    %v1603 = vsub.s32 2, %v1602
    %v1604 = vrot.slane %v1591, %v1603
    %v1605 = vlaneseq
    %v1606 = vshrl.u32 %v1605, 7
    %v1607 = vsub.s32 3, %v1606
    %v1608 = vrot.slane %v1591, %v1607
    %v1613 = vadd.f32 %v1587, %v1596
    %v1614 = vadd.f32 %v1588, %v1600
    %v1615 = vadd.f32 %v1589, %v1604
    %v1616 = vadd.f32 %v1590, %v1608
    %v1617 = vmax.f32 %v1613, 0.0
    %v1618 = vmax.f32 %v1614, 0.0
    %v1619 = vmax.f32 %v1615, 0.0
    %v1620 = vmax.f32 %v1616, 0.0
    %v1621 = vpack.c.bf16 %v1617, %v1617
    %v1622 = vpack.c.bf16 %v1618, %v1618
    %v1623 = vpack.c.bf16 %v1619, %v1619
    %v1624 = vpack.c.bf16 %v1620, %v1620
    %v1625 = vld [vmem:[%s15] sm:$0xf]
    %v1626 = vld [vmem:[%s15 + $0x4] sm:$0xf]
    %v1627 = vld [vmem:[%s15 + $0x8] sm:$0xf]
    %v1628 = vld [vmem:[%s15 + $0xc] sm:$0xf]
    %v1629 = vld [vmem:[%s15 + $0x10] sm:$0xf]
    %v1630 = vld [vmem:[%s15 + $0x14] sm:$0xf]
    %v1631 = vld [vmem:[%s15 + $0x18] sm:$0xf]
    %v1632 = vld [vmem:[%s15 + $0x1c] sm:$0xf]
    %v1633 = vld [vmem:[%s15 + $0x20] sm:$0xf]
    %v1634 = vld [vmem:[%s15 + $0x24] sm:$0xf]
    %v1635 = vld [vmem:[%s15 + $0x28] sm:$0xf]
    %v1636 = vld [vmem:[%s15 + $0x2c] sm:$0xf]
    %v1637 = vld [vmem:[%s15 + $0x30] sm:$0xf]
    %v1638 = vld [vmem:[%s15 + $0x34] sm:$0xf]
    %v1639 = vld [vmem:[%s15 + $0x38] sm:$0xf]
    %v1640 = vld [vmem:[%s15 + $0x3c] sm:$0xf]
    %v1641 = vld [vmem:[%s15 + $0x40] sm:$0xf]
    %v1642 = vld [vmem:[%s15 + $0x44] sm:$0xf]
    %v1643 = vld [vmem:[%s15 + $0x48] sm:$0xf]
    %v1644 = vld [vmem:[%s15 + $0x4c] sm:$0xf]
    %v1645 = vld [vmem:[%s15 + $0x50] sm:$0xf]
    %v1646 = vld [vmem:[%s15 + $0x54] sm:$0xf]
    %v1647 = vld [vmem:[%s15 + $0x58] sm:$0xf]
    %v1648 = vld [vmem:[%s15 + $0x5c] sm:$0xf]
    %v1649 = vld [vmem:[%s15 + $0x60] sm:$0xf]
    %v1650 = vld [vmem:[%s15 + $0x64] sm:$0xf]
    %v1651 = vld [vmem:[%s15 + $0x68] sm:$0xf]
    %v1652 = vld [vmem:[%s15 + $0x6c] sm:$0xf]
    %v1653 = vld [vmem:[%s15 + $0x70] sm:$0xf]
    %v1654 = vld [vmem:[%s15 + $0x74] sm:$0xf]
    %v1655 = vld [vmem:[%s15 + $0x78] sm:$0xf]
    %v1656 = vld [vmem:[%s15 + $0x7c] sm:$0xf]
    %v1657 = vld [vmem:[%s15 + $0x80] sm:$0xf]
    %v1658 = vld [vmem:[%s15 + $0x84] sm:$0xf]
    %v1659 = vld [vmem:[%s15 + $0x88] sm:$0xf]
    %v1660 = vld [vmem:[%s15 + $0x8c] sm:$0xf]
    %v1661 = vld [vmem:[%s15 + $0x90] sm:$0xf]
    %v1662 = vld [vmem:[%s15 + $0x94] sm:$0xf]
    %v1663 = vld [vmem:[%s15 + $0x98] sm:$0xf]
    %v1664 = vld [vmem:[%s15 + $0x9c] sm:$0xf]
    %v1665 = vld [vmem:[%s15 + $0xa0] sm:$0xf]
    %v1666 = vld [vmem:[%s15 + $0xa4] sm:$0xf]
    %v1667 = vld [vmem:[%s15 + $0xa8] sm:$0xf]
    %v1668 = vld [vmem:[%s15 + $0xac] sm:$0xf]
    %v1669 = vld [vmem:[%s15 + $0xb0] sm:$0xf]
    %v1670 = vld [vmem:[%s15 + $0xb4] sm:$0xf]
    %v1671 = vld [vmem:[%s15 + $0xb8] sm:$0xf]
    %v1672 = vld [vmem:[%s15 + $0xbc] sm:$0xf]
    %v1673 = vld [vmem:[%s15 + $0xc0] sm:$0xf]
    %v1674 = vld [vmem:[%s15 + $0xc4] sm:$0xf]
    %v1675 = vld [vmem:[%s15 + $0xc8] sm:$0xf]
    %v1676 = vld [vmem:[%s15 + $0xcc] sm:$0xf]
    %v1677 = vld [vmem:[%s15 + $0xd0] sm:$0xf]
    %v1678 = vld [vmem:[%s15 + $0xd4] sm:$0xf]
    %v1679 = vld [vmem:[%s15 + $0xd8] sm:$0xf]
    %v1680 = vld [vmem:[%s15 + $0xdc] sm:$0xf]
    %v1681 = vld [vmem:[%s15 + $0xe0] sm:$0xf]
    %v1682 = vld [vmem:[%s15 + $0xe4] sm:$0xf]
    %v1683 = vld [vmem:[%s15 + $0xe8] sm:$0xf]
    %v1684 = vld [vmem:[%s15 + $0xec] sm:$0xf]
    %v1685 = vld [vmem:[%s15 + $0xf0] sm:$0xf]
    %v1686 = vld [vmem:[%s15 + $0xf4] sm:$0xf]
    %v1687 = vld [vmem:[%s15 + $0xf8] sm:$0xf]
    %v1688 = vld [vmem:[%s15 + $0xfc] sm:$0xf]
    %v1689 = vld [vmem:[%s16] sm:$0x1]
    %v1691 = vlaneseq
    %v1692 = vshrl.u32 %v1691, 7
    %v1693 = vsub.s32 0, %v1692
    %v1694 = vrot.slane %v1689, %v1693
    %v1760 = vunpack.c.l.b16 %v1625
    %v1761 = vunpack.c.l.b16 %v1626
    %v1762 = vunpack.c.l.b16 %v1627
    %v1763 = vunpack.c.l.b16 %v1628
    %v1764 = vunpack.c.l.b16 %v1629
    %v1765 = vunpack.c.l.b16 %v1630
    %v1766 = vunpack.c.l.b16 %v1631
    %v1767 = vunpack.c.l.b16 %v1632
    %v1768 = vunpack.c.l.b16 %v1633
    %v1769 = vunpack.c.l.b16 %v1634
    %v1770 = vunpack.c.l.b16 %v1635
    %v1771 = vunpack.c.l.b16 %v1636
    %v1772 = vunpack.c.l.b16 %v1637
    %v1773 = vunpack.c.l.b16 %v1638
    %v1774 = vunpack.c.l.b16 %v1639
    %v1775 = vunpack.c.l.b16 %v1640
    %v1776 = vunpack.c.l.b16 %v1641
    %v1777 = vunpack.c.l.b16 %v1642
    %v1778 = vunpack.c.l.b16 %v1643
    %v1779 = vunpack.c.l.b16 %v1644
    %v1780 = vunpack.c.l.b16 %v1645
    %v1781 = vunpack.c.l.b16 %v1646
    %v1782 = vunpack.c.l.b16 %v1647
    %v1783 = vunpack.c.l.b16 %v1648
    %v1784 = vunpack.c.l.b16 %v1649
    %v1785 = vunpack.c.l.b16 %v1650
    %v1786 = vunpack.c.l.b16 %v1651
    %v1787 = vunpack.c.l.b16 %v1652
    %v1788 = vunpack.c.l.b16 %v1653
    %v1789 = vunpack.c.l.b16 %v1654
    %v1790 = vunpack.c.l.b16 %v1655
    %v1791 = vunpack.c.l.b16 %v1656
    %v1792 = vunpack.c.l.b16 %v1657
    %v1793 = vunpack.c.l.b16 %v1658
    %v1794 = vunpack.c.l.b16 %v1659
    %v1795 = vunpack.c.l.b16 %v1660
    %v1796 = vunpack.c.l.b16 %v1661
    %v1797 = vunpack.c.l.b16 %v1662
    %v1798 = vunpack.c.l.b16 %v1663
    %v1799 = vunpack.c.l.b16 %v1664
    %v1800 = vunpack.c.l.b16 %v1665
    %v1801 = vunpack.c.l.b16 %v1666
    %v1802 = vunpack.c.l.b16 %v1667
    %v1803 = vunpack.c.l.b16 %v1668
    %v1804 = vunpack.c.l.b16 %v1669
    %v1805 = vunpack.c.l.b16 %v1670
    %v1806 = vunpack.c.l.b16 %v1671
    %v1807 = vunpack.c.l.b16 %v1672
    %v1808 = vunpack.c.l.b16 %v1673
    %v1809 = vunpack.c.l.b16 %v1674
    %v1810 = vunpack.c.l.b16 %v1675
    %v1811 = vunpack.c.l.b16 %v1676
    %v1812 = vunpack.c.l.b16 %v1677
    %v1813 = vunpack.c.l.b16 %v1678
    %v1814 = vunpack.c.l.b16 %v1679
    %v1815 = vunpack.c.l.b16 %v1680
    %v1816 = vunpack.c.l.b16 %v1681
    %v1817 = vunpack.c.l.b16 %v1682
    %v1818 = vunpack.c.l.b16 %v1683
    %v1819 = vunpack.c.l.b16 %v1684
    %v1820 = vunpack.c.l.b16 %v1685
    %v1821 = vunpack.c.l.b16 %v1686
    %v1822 = vunpack.c.l.b16 %v1687
    %v1823 = vunpack.c.l.b16 %v1688
    %v1824 = vpack.c.b16 %v1761, %v1760
    %v1825 = vpack.c.b16 %v1763, %v1762
    %v1826 = vpack.c.b16 %v1765, %v1764
    %v1827 = vpack.c.b16 %v1767, %v1766
    %v1828 = vpack.c.b16 %v1769, %v1768
    %v1829 = vpack.c.b16 %v1771, %v1770
    %v1830 = vpack.c.b16 %v1773, %v1772
    %v1831 = vpack.c.b16 %v1775, %v1774
    %v1832 = vpack.c.b16 %v1777, %v1776
    %v1833 = vpack.c.b16 %v1779, %v1778
    %v1834 = vpack.c.b16 %v1781, %v1780
    %v1835 = vpack.c.b16 %v1783, %v1782
    %v1836 = vpack.c.b16 %v1785, %v1784
    %v1837 = vpack.c.b16 %v1787, %v1786
    %v1838 = vpack.c.b16 %v1789, %v1788
    %v1839 = vpack.c.b16 %v1791, %v1790
    %v1840 = vpack.c.b16 %v1793, %v1792
    %v1841 = vpack.c.b16 %v1795, %v1794
    %v1842 = vpack.c.b16 %v1797, %v1796
    %v1843 = vpack.c.b16 %v1799, %v1798
    %v1844 = vpack.c.b16 %v1801, %v1800
    %v1845 = vpack.c.b16 %v1803, %v1802
    %v1846 = vpack.c.b16 %v1805, %v1804
    %v1847 = vpack.c.b16 %v1807, %v1806
    %v1848 = vpack.c.b16 %v1809, %v1808
    %v1849 = vpack.c.b16 %v1811, %v1810
    %v1850 = vpack.c.b16 %v1813, %v1812
    %v1851 = vpack.c.b16 %v1815, %v1814
    %v1852 = vpack.c.b16 %v1817, %v1816
    %v1853 = vpack.c.b16 %v1819, %v1818
    %v1854 = vpack.c.b16 %v1821, %v1820
    %v1855 = vpack.c.b16 %v1823, %v1822
    %1888 = vmatprep.subr.bf16.mxu0 0
    %1889 = vmatpush1.bf16.msra.mxu0 %v1824
    %1890 = vmatprep.subr.bf16.mxu0 0
    %1891 = vmatpush1.bf16.msra.mxu0 %v1825
    %1892 = vmatprep.subr.bf16.mxu0 0
    %1893 = vmatpush1.bf16.msra.mxu0 %v1826
    %1894 = vmatprep.subr.bf16.mxu0 0
    %1895 = vmatpush1.bf16.msra.mxu0 %v1827
    %1896 = vmatprep.subr.bf16.mxu0 0
    %1897 = vmatpush1.bf16.msra.mxu0 %v1828
    %1898 = vmatprep.subr.bf16.mxu0 0
    %1899 = vmatpush1.bf16.msra.mxu0 %v1829
    %1900 = vmatprep.subr.bf16.mxu0 0
    %1901 = vmatpush1.bf16.msra.mxu0 %v1830
    %1902 = vmatprep.subr.bf16.mxu0 0
    %1903 = vmatpush1.bf16.msra.mxu0 %v1831
    %1904 = vmatprep.subr.bf16.mxu0 0
    %1905 = vmatpush1.bf16.msra.mxu0 %v1832
    %1906 = vmatprep.subr.bf16.mxu0 0
    %1907 = vmatpush1.bf16.msra.mxu0 %v1833
    %1908 = vmatprep.subr.bf16.mxu0 0
    %1909 = vmatpush1.bf16.msra.mxu0 %v1834
    %1910 = vmatprep.subr.bf16.mxu0 0
    %1911 = vmatpush1.bf16.msra.mxu0 %v1835
    %1912 = vmatprep.subr.bf16.mxu0 0
    %1913 = vmatpush1.bf16.msra.mxu0 %v1836
    %1914 = vmatprep.subr.bf16.mxu0 0
    %1915 = vmatpush1.bf16.msra.mxu0 %v1837
    %1916 = vmatprep.subr.bf16.mxu0 0
    %1917 = vmatpush1.bf16.msra.mxu0 %v1838
    %1918 = vmatprep.subr.bf16.mxu0 0
    %1919 = vmatpush1.bf16.msra.mxu0 %v1839
    %1920 = vmatprep.mubr.bf16.mxu0 %v1622
    %1921 = vmatmul.mubr.bf16.gmra.mrb[0].mxu0 %v1621
    %v1922 = vpop.f32.mrb[0].mxu0
    %v1923 = vadd.f32 %v1694, %v1922
    %v1924 = vpop.f32.mrb[0].mxu0
    %v1925 = vpop.f32.mrb[0].mxu0
    %v1926 = vpop.f32.mrb[0].mxu0
    %1927 = vdwg.mxu0
    %1928 = vmatprep.subr.bf16.mxu0 0
    %1929 = vmatpush1.bf16.msra.mxu0 %v1840
    %1930 = vmatprep.subr.bf16.mxu0 0
    %1931 = vmatpush1.bf16.msra.mxu0 %v1841
    %1932 = vmatprep.subr.bf16.mxu0 0
    %1933 = vmatpush1.bf16.msra.mxu0 %v1842
    %1934 = vmatprep.subr.bf16.mxu0 0
    %1935 = vmatpush1.bf16.msra.mxu0 %v1843
    %1936 = vmatprep.subr.bf16.mxu0 0
    %1937 = vmatpush1.bf16.msra.mxu0 %v1844
    %1938 = vmatprep.subr.bf16.mxu0 0
    %1939 = vmatpush1.bf16.msra.mxu0 %v1845
    %1940 = vmatprep.subr.bf16.mxu0 0
    %1941 = vmatpush1.bf16.msra.mxu0 %v1846
    %1942 = vmatprep.subr.bf16.mxu0 0
    %1943 = vmatpush1.bf16.msra.mxu0 %v1847
    %1944 = vmatprep.subr.bf16.mxu0 0
    %1945 = vmatpush1.bf16.msra.mxu0 %v1848
    %1946 = vmatprep.subr.bf16.mxu0 0
    %1947 = vmatpush1.bf16.msra.mxu0 %v1849
    %1948 = vmatprep.subr.bf16.mxu0 0
    %1949 = vmatpush1.bf16.msra.mxu0 %v1850
    %1950 = vmatprep.subr.bf16.mxu0 0
    %1951 = vmatpush1.bf16.msra.mxu0 %v1851
    %1952 = vmatprep.subr.bf16.mxu0 0
    %1953 = vmatpush1.bf16.msra.mxu0 %v1852
    %1954 = vmatprep.subr.bf16.mxu0 0
    %1955 = vmatpush1.bf16.msra.mxu0 %v1853
    %1956 = vmatprep.subr.bf16.mxu0 0
    %1957 = vmatpush1.bf16.msra.mxu0 %v1854
    %1958 = vmatprep.subr.bf16.mxu0 0
    %1959 = vmatpush1.bf16.msra.mxu0 %v1855
    %1960 = vmatprep.mubr.bf16.mxu0 %v1624
    %1961 = vmatmul.mubr.bf16.gmra.mrb[0].mxu0 %v1623
    %v1962 = vpop.f32.mrb[0].mxu0
    %v1963 = vadd.f32 %v1923, %v1962
    %v1964 = vpop.f32.mrb[0].mxu0
    %v1965 = vpop.f32.mrb[0].mxu0
    %v1966 = vpop.f32.mrb[0].mxu0
    %1967 = vdwg.mxu0
    %1968 = vst.msk [vmem:[#allocation13] sm:$0xff] %vm190, %v1064
    %1970 = vrot.lane.b32.xlu0 %v1963, 16
    %v1971 = vpop.permute.xlu0 %1970
    %vm1973 = vcmask 269440
    %1974 = vst.msk [vmem:[#allocation13] sm:$0xff] %vm1973, %v1971
    // Predicated region
    $region94: #{tpu_custom_call.1} parent=1 // pred_check
      _
    $region95: #{tpu_custom_call.1} parent=1 // pred_check_branch
      %1976 = sbr.rel (0) target = $region97
    $region96: #{tpu_custom_call.1} parent=1 // pred_region
      %s1978 = ssub.s32 128, 128
      %1979 = vsyncadd [#allocation4], %s1978
      %s1981 = sshll.u32 [#allocation13], 4
      %s1982 = int_to_ptr.vmem [resolvable:$true] %s1981
      %1984 = dma.vmem_to_hbm [thread:$0]  %s1982, 128, %s17, [#allocation4]
    $region97: #{tpu_custom_call.1} parent=1 // pred_fallthru
      _
    // Predicated region
    $region98: #{tpu_custom_call.1} parent=1 // pred_check
      _
    $region99: #{tpu_custom_call.1} parent=1 // pred_check_branch
      %1986 = sbr.rel (0) target = $region101
    $region100: #{tpu_custom_call.1} parent=1 // pred_region
      %1987 = dma.done [#allocation4], 128
    $region101: #{tpu_custom_call.1} parent=1 // pred_fallthru
      _
    %1988 = vsyncpa [#allocation3], 1
    %1989 = vsyncpa [#allocation6], 1
    %1990 = vsyncpa [#allocation9], 1
    %1991 = vsyncpa [#allocation12], 1
    %1992 = vsyncpa [#allocation4], 1

</llo_original>
